<compile_context>
chip_gen: v7x
topology: tpu7x:2x2x1
jax: 0.10.0
libtpu: 0.0.40
codegen_flags: <defaults>
</compile_context>

<pallas_src>
import functools

import jax
import jax.numpy as jnp
from jax.experimental import pallas as pl
from jax.experimental.pallas import tpu as pltpu


def _rvq_kernel(z_ref, w_in_ref, b_in_ref, c_n_ref, cbi_t_ref, w_out_ref, b_out_ref,
                zq_ref, codes_ref, lat_ref, loss_ref, r_ref, *, use_bf16=False):
    """Grid = (B, T_tiles, n_codebooks); quantizer axis innermost ("arbitrary")."""
    i = pl.program_id(2)
    d = w_in_ref.shape[1]

    # The only resident big-tensor state is the residual (VMEM scratch):
    # init to z at i==0, subtract z_q_i each quantizer, emit zq = z - r at the end.
    @pl.when(i == 0)
    def _():
        r_ref[...] = z_ref[0]

    # All N quantizers' constants are resident in VMEM; dynamic-index by i.
    w_in = w_in_ref[i]          # (d, D)
    b_in = b_in_ref[i]          # (d, 1)
    c_n = c_n_ref[i]            # (K, d)      l2-normalized codebook
    cbi_t = cbi_t_ref[i]        # (d_pad, K)  [codebook^T ; iota ; zero pad]
    w_out = w_out_ref[i]        # (D, d)
    b_out = b_out_ref[i]        # (D, 1)

    r = r_ref[...]              # (D, tT)

    def mm(a, b):
        if use_bf16:
            a = a.astype(jnp.bfloat16)
            b = b.astype(jnp.bfloat16)
        return jnp.dot(a, b, preferred_element_type=jnp.float32)

    # ---- in_proj (1x1 conv): (d, D) @ (D, tT) ----
    z_e = mm(w_in, r) + b_in                                        # (d, tT)

    # ---- cosine-similarity nearest neighbour ----
    ss = jnp.sum(z_e * z_e, axis=0, keepdims=True)                  # (1, tT)
    e_n = z_e * jax.lax.rsqrt(jnp.maximum(ss, 1e-24))               # == z_e / max(||z_e||, 1e-12)
    sim = mm(c_n, e_n)                                              # (K, tT)
    smax = jnp.max(sim, axis=0, keepdims=True)                      # (1, tT)
    # One element-wise pass builds the one-hot; index + raw codebook row are then
    # recovered together by a single MXU matmul.  Assumes finite inputs; exact
    # similarity ties are measure-zero with float data.
    onehot = (sim == smax).astype(jnp.float32)                      # (K, tT)

    g = jnp.dot(cbi_t, onehot, preferred_element_type=jnp.float32)  # (d_pad, tT)
    z_q_c = g[:d]                                                   # (d, tT) raw codebook rows
    idx = g[d:d + 1]                                                # (1, tT) argmax, exact in f32

    codes_ref[0, 0] = idx.astype(jnp.int32)
    lat_ref[0, 0] = z_e
    diff = z_e - z_q_c
    loss_ref[0, 0] = jnp.sum(diff * diff, axis=0, keepdims=True)    # lane-dense sq-err partials

    # ---- out_proj (1x1 conv): (D, d) @ (d, tT), then residual update ----
    z_q_i = mm(w_out, z_q_c) + b_out                                # (D, tT)
    r_ref[...] = r - z_q_i

    @pl.when(i == pl.num_programs(2) - 1)
    def _():
        zq_ref[0] = z_ref[0] - r_ref[...]       # eval mode: dropout mask is all-ones


def _vmem_limit_bytes():
    # Chip-aware scoped-VMEM limit: v5e/v6e have 128 MiB physical (cap at 96 MiB),
    # v7x only has 64 MiB (3/4 -> 48 MiB).
    try:
        cap = pltpu.get_tpu_info().vmem_capacity_bytes
        return int(min(cap * 3 // 4, 96 * 1024 * 1024))
    except Exception:
        return None


def _estimate_vmem(tT, N, D, K, d, d_pad):
    f = 4
    z_zq = 2 * 2 * D * tT * f                 # z in + zq out, double-buffered
    resid = D * tT * f                        # residual scratch
    interm = 4 * K * tT * f                   # sim / onehot / compare temporaries
    small_out = 2 * (d + 2) * tT * f          # latents + codes + loss blocks (dbl-buffered)
    weights = 2 * N * (2 * d * D + K * d + d_pad * K + D + d) * f
    return z_zq + resid + interm + small_out + weights


def _choose_tile(T, B, N, D, K, d, d_pad, vmem_limit):
    budget = (vmem_limit if vmem_limit else 32 * 1024 * 1024) // 2
    fitting = [tt for tt in (1024, 512, 256, 128)
               if T % tt == 0 and _estimate_vmem(tt, N, D, K, d, d_pad) <= budget]
    if not fitting:
        return 128 if T % 128 == 0 else T
    # Largest tile that still leaves >= 4 parallel (b, t) units (v7x has 2 TCs).
    for tt in fitting:
        if B * (T // tt) >= 4:
            return tt
    return fitting[-1]


def rvq_forward(z_bdt, w_in, b_in, codebooks, w_out, b_out,
                tile_t=None, use_bf16_matmul=False):
    """z_bdt: [B, D, T] float32 (PyTorch layout).  Returns torch-convention outputs."""
    B, D, T = z_bdt.shape
    N, d, _ = w_in.shape
    K = codebooks.shape[1]
    d_pad = ((d + 1 + 7) // 8) * 8            # codebook rows + iota row, padded to sublanes

    vmem_limit = _vmem_limit_bytes()
    tT = tile_t if tile_t is not None else _choose_tile(T, B, N, D, K, d, d_pad, vmem_limit)
    assert T % tT == 0, "time axis must be divisible by the time tile"
    num_t = T // tT

    # one-time wrapper-side weight prep (no in-kernel transposes)
    b_in_r = b_in.reshape(N, d, 1)
    b_out_r = b_out.reshape(N, D, 1)
    c_n = codebooks / jnp.maximum(
        jnp.linalg.norm(codebooks, axis=-1, keepdims=True), 1e-12)          # (N, K, d)
    cb_t = jnp.transpose(codebooks, (0, 2, 1))                              # (N, d, K)
    iota_row = jnp.broadcast_to(
        jnp.arange(K, dtype=jnp.float32)[None, None, :], (N, 1, K))
    parts = [cb_t, iota_row]
    if d_pad - d - 1 > 0:
        parts.append(jnp.zeros((N, d_pad - d - 1, K), jnp.float32))
    cbi_t = jnp.concatenate(parts, axis=1)                                  # (N, d_pad, K)

    out_shapes = (
        jax.ShapeDtypeStruct((B, D, T), jnp.float32),        # summed z_q (NCT layout)
        jax.ShapeDtypeStruct((N, B, 1, T), jnp.int32),       # codes
        jax.ShapeDtypeStruct((N, B, d, T), jnp.float32),     # latents (z_e per quantizer)
        jax.ShapeDtypeStruct((N, B, 1, T), jnp.float32),     # per-lane sq-err partials
    )

    grid_spec = pltpu.PrefetchScalarGridSpec(
        num_scalar_prefetch=0,
        grid=(B, num_t, N),
        in_specs=[
            pl.BlockSpec((1, D, tT), lambda b, t, i: (b, 0, t)),    # z (resident across i)
            pl.BlockSpec((N, d, D), lambda b, t, i: (0, 0, 0)),     # W_in   (all quantizers)
            pl.BlockSpec((N, d, 1), lambda b, t, i: (0, 0, 0)),     # b_in
            pl.BlockSpec((N, K, d), lambda b, t, i: (0, 0, 0)),     # normalized codebooks
            pl.BlockSpec((N, d_pad, K), lambda b, t, i: (0, 0, 0)),  # [codebook^T ; iota]
            pl.BlockSpec((N, D, d), lambda b, t, i: (0, 0, 0)),     # W_out
            pl.BlockSpec((N, D, 1), lambda b, t, i: (0, 0, 0)),     # b_out
        ],
        out_specs=[
            pl.BlockSpec((1, D, tT), lambda b, t, i: (b, 0, t)),        # zq, written at i==N-1
            pl.BlockSpec((1, 1, 1, tT), lambda b, t, i: (i, b, 0, t)),  # codes
            pl.BlockSpec((1, 1, d, tT), lambda b, t, i: (i, b, 0, t)),  # latents
            pl.BlockSpec((1, 1, 1, tT), lambda b, t, i: (i, b, 0, t)),  # loss partials
        ],
        scratch_shapes=[pltpu.VMEM((D, tT), jnp.float32)],              # residual
    )

    cp_kwargs = dict(dimension_semantics=("parallel", "parallel", "arbitrary"))
    if vmem_limit is not None:
        cp_kwargs["vmem_limit_bytes"] = vmem_limit

    kernel = functools.partial(_rvq_kernel, use_bf16=use_bf16_matmul)

    zq, codes_raw, lat_raw, loss_raw = pl.pallas_call(
        kernel,
        out_shape=out_shapes,
        grid_spec=grid_spec,
        compiler_params=pltpu.CompilerParams(**cp_kwargs),
    )(z_bdt, w_in, b_in_r, c_n, cbi_t, w_out, b_out_r)

    # back to PyTorch conventions
    codes = jnp.transpose(codes_raw[:, :, 0, :], (1, 0, 2))                   # [B, N, T]
    latents = jnp.transpose(lat_raw, (1, 0, 2, 3)).reshape(B, N * d, T)       # [B, N*d, T]
    per_ib = jnp.sum(loss_raw[:, :, 0, :], axis=-1) / float(T * d)            # (N, B)
    commitment_loss = jnp.sum(jnp.mean(per_ib, axis=1))                       # sum_i mean_b
    codebook_loss = commitment_loss                                           # identical forward value
    n_q_minus_1 = jnp.full((B,), N - 1, dtype=jnp.int32)                      # clamp(N+1, max=N) - 1
    # TODO(synk): training-mode stale-code replacement / quantizer-dropout masks are
    # stateful, RNG-driven host-side logic and are not implemented (eval forward only).
    return zq, codes, latents, commitment_loss, codebook_loss, n_q_minus_1


# ---------------- pure-JAX reference (for correctness check) ----------------
def rvq_reference(z_bdt, w_in, b_in, codebooks, w_out, b_out):
    B, D, T = z_bdt.shape
    N, d, _ = w_in.shape
    residual = z_bdt
    z_q = jnp.zeros_like(z_bdt)
    codes, lats, closs = [], [], 0.0
    for i in range(N):
        z_e = jnp.einsum('dD,bDt->bdt', w_in[i], residual) + b_in[i][:, None]  # [B,d,T]
        enc = jnp.transpose(z_e, (0, 2, 1)).reshape(B * T, d)
        e_n = enc / jnp.maximum(jnp.linalg.norm(enc, axis=1, keepdims=True), 1e-12)
        cb = codebooks[i]
        c_n = cb / jnp.maximum(jnp.linalg.norm(cb, axis=1, keepdims=True), 1e-12)
        dist = (jnp.sum(e_n**2, 1, keepdims=True) - 2 * e_n @ c_n.T
                + jnp.sum(c_n**2, 1)[None, :])
        idx = jnp.argmin(dist, axis=1)
        z_q_c = cb[idx].reshape(B, T, d)
        z_q_c_bdt = jnp.transpose(z_q_c, (0, 2, 1))
        closs = closs + jnp.mean(jnp.mean((z_e - z_q_c_bdt) ** 2, axis=(1, 2)))
        z_q_i = jnp.einsum('Dd,bdt->bDt', w_out[i], z_q_c_bdt) + b_out[i][:, None]
        z_q = z_q + z_q_i
        residual = residual - z_q_i
        codes.append(idx.reshape(B, T))
        lats.append(z_e)
    return (z_q, jnp.stack(codes, 1), jnp.concatenate(lats, 1), closs, closs)


if __name__ == "__main__":
    # small shapes consistent with the module (T chosen so the tiled path runs)
    B, D, T = 2, 32, 256         # batch, input_dim, time
    N, K, d = 4, 64, 8           # n_codebooks, codebook_size, codebook_dim

    key = jax.random.PRNGKey(0)
    ks = jax.random.split(key, 8)

    z = jax.random.normal(ks[0], (B, D, T), dtype=jnp.float32)

    # weight_norm'd 1x1 convs: effective weight = g * v / ||v|| (per out channel)
    v_in = jax.random.normal(ks[1], (N, d, D), dtype=jnp.float32)
    g_in = jnp.abs(jax.random.normal(ks[2], (N, d, 1), dtype=jnp.float32)) + 0.5
    w_in = g_in * v_in / jnp.linalg.norm(v_in, axis=2, keepdims=True)
    b_in = 0.1 * jax.random.normal(ks[3], (N, d), dtype=jnp.float32)

    v_out = jax.random.normal(ks[4], (N, D, d), dtype=jnp.float32)
    g_out = jnp.abs(jax.random.normal(ks[5], (N, D, 1), dtype=jnp.float32)) + 0.5
    w_out = g_out * v_out / jnp.linalg.norm(v_out, axis=2, keepdims=True)
    b_out = 0.1 * jax.random.normal(ks[6], (N, D), dtype=jnp.float32)

    codebooks = jax.random.normal(ks[7], (N, K, d), dtype=jnp.float32)

    # default (chip/shape-aware) tile chooser -> tT=128 here: exercises multi-tile
    # residency of z / the residual scratch and the resident zq output block.
    outs = rvq_forward(z, w_in, b_in, codebooks, w_out, b_out)
    outs = jax.block_until_ready(outs)
    z_q, codes, latents, closs, qloss, nq = outs

    # sanity check against the pure-JAX reference
    zr, cr, lr, clr, qlr = rvq_reference(z, w_in, b_in, codebooks, w_out, b_out)
    assert z_q.shape == (B, D, T) and codes.shape == (B, N, T) and latents.shape == (B, N * d, T)
    assert jnp.array_equal(codes, cr)
    assert jnp.allclose(z_q, zr, rtol=1e-3, atol=1e-3)
    assert jnp.allclose(latents, lr, rtol=1e-3, atol=1e-3)
    assert jnp.allclose(closs, clr, rtol=1e-3, atol=1e-3)
    assert jnp.allclose(qloss, qlr, rtol=1e-3, atol=1e-3)
    assert nq.shape == (B,) and int(nq[0]) == N - 1

    print("KERNEL_OK")
</pallas_src>

<mosaic_0001>
module attributes {stable_mosaic.version = 11 : i64} {
  func.func @_rvq_kernel(%arg0: i32, %arg1: i32, %arg2: i32, %arg3: memref<1x32x128xf32, #tpu.memory_space<vmem>>, %arg4: memref<4x8x32xf32, #tpu.memory_space<vmem>>, %arg5: memref<4x8x1xf32, #tpu.memory_space<vmem>>, %arg6: memref<4x64x8xf32, #tpu.memory_space<vmem>>, %arg7: memref<4x16x64xf32, #tpu.memory_space<vmem>>, %arg8: memref<4x32x8xf32, #tpu.memory_space<vmem>>, %arg9: memref<4x32x1xf32, #tpu.memory_space<vmem>>, %arg10: memref<1x32x128xf32, #tpu.memory_space<vmem>>, %arg11: memref<1x1x1x128xi32, #tpu.memory_space<vmem>>, %arg12: memref<1x1x8x128xf32, #tpu.memory_space<vmem>>, %arg13: memref<1x1x1x128xf32, #tpu.memory_space<vmem>>, %arg14: memref<32x128xf32, #tpu.memory_space<vmem>>) attributes {dimension_semantics = [#tpu.dimension_semantics<parallel>, #tpu.dimension_semantics<parallel>, #tpu.dimension_semantics<arbitrary>], iteration_bounds = array<i64: 2, 2, 4>, scalar_prefetch = 0 : i64, scratch_operands = 1 : i64, tpu.core_type = #tpu.core_type<tc>, window_params = [{transform_indices = @transform_0, window_bounds = array<i64: 1, 32, 128>}, {pipeline_mode = #tpu.pipeline_mode<synchronous>, transform_indices = @transform_1, window_bounds = array<i64: 4, 8, 32>}, {pipeline_mode = #tpu.pipeline_mode<synchronous>, transform_indices = @transform_2, window_bounds = array<i64: 4, 8, 1>}, {pipeline_mode = #tpu.pipeline_mode<synchronous>, transform_indices = @transform_3, window_bounds = array<i64: 4, 64, 8>}, {pipeline_mode = #tpu.pipeline_mode<synchronous>, transform_indices = @transform_4, window_bounds = array<i64: 4, 16, 64>}, {pipeline_mode = #tpu.pipeline_mode<synchronous>, transform_indices = @transform_5, window_bounds = array<i64: 4, 32, 8>}, {pipeline_mode = #tpu.pipeline_mode<synchronous>, transform_indices = @transform_6, window_bounds = array<i64: 4, 32, 1>}, {transform_indices = @transform_7, window_bounds = array<i64: 1, 32, 128>}, {transform_indices = @transform_8, window_bounds = array<i64: 1, 1, 1, 128>}, {transform_indices = @transform_9, window_bounds = array<i64: 1, 1, 8, 128>}, {transform_indices = @transform_10, window_bounds = array<i64: 1, 1, 1, 128>}]} {
    %c0_i32 = arith.constant 0 : i32
    %0 = arith.cmpi eq, %arg2, %c0_i32 : i32
    %1 = arith.extui %0 : i1 to i32
    %c0_i32_0 = arith.constant 0 : i32
    %2 = arith.cmpi ne, %1, %c0_i32_0 : i32
    scf.if %2 {
      %c0_36 = arith.constant 0 : index
      %c0_37 = arith.constant 0 : index
      %c0_38 = arith.constant 0 : index
      %65 = vector.load %arg3[%c0_36, %c0_37, %c0_38] : memref<1x32x128xf32, #tpu.memory_space<vmem>>, vector<1x32x128xf32>
      %66 = vector.shape_cast %65 : vector<1x32x128xf32> to vector<32x128xf32>
      %c0_39 = arith.constant 0 : index
      %c0_40 = arith.constant 0 : index
      %67 = vector.load %arg14[%c0_39, %c0_40] : memref<32x128xf32, #tpu.memory_space<vmem>>, vector<32x128xf32>
      tpu.vector_store %arg14[%c0_39, %c0_40], %66 {strides = array<i32>} : memref<32x128xf32, #tpu.memory_space<vmem>>, vector<32x128xf32>,
    } else {
    }
    %3 = arith.index_cast %arg2 : i32 to index
    %c0 = arith.constant 0 : index
    %c0_1 = arith.constant 0 : index
    %4 = vector.load %arg4[%3, %c0, %c0_1] : memref<4x8x32xf32, #tpu.memory_space<vmem>>, vector<1x8x32xf32>
    %5 = vector.shape_cast %4 : vector<1x8x32xf32> to vector<8x32xf32>
    %6 = arith.index_cast %arg2 : i32 to index
    %c0_2 = arith.constant 0 : index
    %c0_3 = arith.constant 0 : index
    %7 = vector.load %arg5[%6, %c0_2, %c0_3] : memref<4x8x1xf32, #tpu.memory_space<vmem>>, vector<1x8x1xf32>
    %8 = vector.shape_cast %7 : vector<1x8x1xf32> to vector<8x1xf32>
    %9 = arith.index_cast %arg2 : i32 to index
    %c0_4 = arith.constant 0 : index
    %c0_5 = arith.constant 0 : index
    %10 = vector.load %arg6[%9, %c0_4, %c0_5] : memref<4x64x8xf32, #tpu.memory_space<vmem>>, vector<1x64x8xf32>
    %11 = vector.shape_cast %10 : vector<1x64x8xf32> to vector<64x8xf32>
    %12 = arith.index_cast %arg2 : i32 to index
    %c0_6 = arith.constant 0 : index
    %c0_7 = arith.constant 0 : index
    %13 = vector.load %arg7[%12, %c0_6, %c0_7] : memref<4x16x64xf32, #tpu.memory_space<vmem>>, vector<1x16x64xf32>
    %14 = vector.shape_cast %13 : vector<1x16x64xf32> to vector<16x64xf32>
    %15 = arith.index_cast %arg2 : i32 to index
    %c0_8 = arith.constant 0 : index
    %c0_9 = arith.constant 0 : index
    %16 = vector.load %arg8[%15, %c0_8, %c0_9] : memref<4x32x8xf32, #tpu.memory_space<vmem>>, vector<1x32x8xf32>
    %17 = vector.shape_cast %16 : vector<1x32x8xf32> to vector<32x8xf32>
    %18 = arith.index_cast %arg2 : i32 to index
    %c0_10 = arith.constant 0 : index
    %c0_11 = arith.constant 0 : index
    %19 = vector.load %arg9[%18, %c0_10, %c0_11] : memref<4x32x1xf32, #tpu.memory_space<vmem>>, vector<1x32x1xf32>
    %20 = vector.shape_cast %19 : vector<1x32x1xf32> to vector<32x1xf32>
    %c0_12 = arith.constant 0 : index
    %c0_13 = arith.constant 0 : index
    %21 = vector.load %arg14[%c0_12, %c0_13] : memref<32x128xf32, #tpu.memory_space<vmem>>, vector<32x128xf32>
    %cst = arith.constant dense<0.000000e+00> : vector<8x128xf32>
    %22 = tpu.matmul %5, %21, %cst {dimension_numbers = #tpu.dot_dimension_numbers<[1], [0], [0], [1], [0, 0, 1, 1], [], []>} : vector<8x32xf32>, vector<32x128xf32>, vector<8x128xf32> -> vector<8x128xf32>
    %23 = vector.broadcast %8 : vector<8x1xf32> to vector<8x128xf32>
    %24 = arith.addf %22, %23 : vector<8x128xf32>
    %25 = arith.mulf %24, %24 : vector<8x128xf32>
    %cst_14 = arith.constant dense<0.000000e+00> : vector<128xf32>
    %26 = vector.multi_reduction <add>, %25, %cst_14 [0] : vector<8x128xf32> to vector<128xf32>
    %27 = vector.shape_cast %26 : vector<128xf32> to vector<1x128xf32>
    %cst_15 = arith.constant 1.000000e-24 : f32
    %28 = vector.broadcast %cst_15 : f32 to vector<1x128xf32>
    %29 = arith.maximumf %27, %28 : vector<1x128xf32>
    %30 = math.rsqrt %29 : vector<1x128xf32>
    %31 = vector.broadcast %30 : vector<1x128xf32> to vector<8x128xf32>
    %32 = arith.mulf %24, %31 : vector<8x128xf32>
    %cst_16 = arith.constant dense<0.000000e+00> : vector<64x128xf32>
    %33 = tpu.matmul %11, %32, %cst_16 {dimension_numbers = #tpu.dot_dimension_numbers<[1], [0], [0], [1], [0, 0, 1, 1], [], []>} : vector<64x8xf32>, vector<8x128xf32>, vector<64x128xf32> -> vector<64x128xf32>
    %cst_17 = arith.constant dense<0xFF800000> : vector<128xf32>
    %34 = vector.multi_reduction <maximumf>, %33, %cst_17 [0] : vector<64x128xf32> to vector<128xf32>
    %35 = vector.shape_cast %34 : vector<128xf32> to vector<1x128xf32>
    %36 = vector.broadcast %35 : vector<1x128xf32> to vector<64x128xf32>
    %37 = arith.cmpf oeq, %33, %36 : vector<64x128xf32>
    %38 = arith.extui %37 : vector<64x128xi1> to vector<64x128xi32>
    %39 = arith.sitofp %38 : vector<64x128xi32> to vector<64x128xf32>
    %cst_18 = arith.constant dense<0.000000e+00> : vector<16x128xf32>
    %40 = tpu.matmul %14, %39, %cst_18 {dimension_numbers = #tpu.dot_dimension_numbers<[1], [0], [0], [1], [0, 0, 1, 1], [], []>} : vector<16x64xf32>, vector<64x128xf32>, vector<16x128xf32> -> vector<16x128xf32>
    %41 = vector.extract_strided_slice %40 {offsets = [0, 0], sizes = [8, 128], strides = [1, 1]} : vector<16x128xf32> to vector<8x128xf32>
    %42 = vector.extract_strided_slice %40 {offsets = [8, 0], sizes = [1, 128], strides = [1, 1]} : vector<16x128xf32> to vector<1x128xf32>
    %43 = arith.fptosi %42 : vector<1x128xf32> to vector<1x128xi32>
    %c0_19 = arith.constant 0 : index
    %c0_20 = arith.constant 0 : index
    %c0_21 = arith.constant 0 : index
    %c0_22 = arith.constant 0 : index
    %44 = vector.load %arg11[%c0_19, %c0_20, %c0_21, %c0_22] : memref<1x1x1x128xi32, #tpu.memory_space<vmem>>, vector<1x1x1x128xi32>
    %45 = vector.shape_cast %44 : vector<1x1x1x128xi32> to vector<1x128xi32>
    %46 = vector.shape_cast %43 : vector<1x128xi32> to vector<1x1x1x128xi32>
    tpu.vector_store %arg11[%c0_19, %c0_20, %c0_21, %c0_22], %46 {strides = array<i32>} : memref<1x1x1x128xi32, #tpu.memory_space<vmem>>, vector<1x1x1x128xi32>,
    %c0_23 = arith.constant 0 : index
    %c0_24 = arith.constant 0 : index
    %c0_25 = arith.constant 0 : index
    %c0_26 = arith.constant 0 : index
    %47 = vector.load %arg12[%c0_23, %c0_24, %c0_25, %c0_26] : memref<1x1x8x128xf32, #tpu.memory_space<vmem>>, vector<1x1x8x128xf32>
    %48 = vector.shape_cast %47 : vector<1x1x8x128xf32> to vector<8x128xf32>
    %49 = vector.shape_cast %24 : vector<8x128xf32> to vector<1x1x8x128xf32>
    tpu.vector_store %arg12[%c0_23, %c0_24, %c0_25, %c0_26], %49 {strides = array<i32>} : memref<1x1x8x128xf32, #tpu.memory_space<vmem>>, vector<1x1x8x128xf32>,
    %50 = arith.subf %24, %41 : vector<8x128xf32>
    %51 = arith.mulf %50, %50 : vector<8x128xf32>
    %cst_27 = arith.constant dense<0.000000e+00> : vector<128xf32>
    %52 = vector.multi_reduction <add>, %51, %cst_27 [0] : vector<8x128xf32> to vector<128xf32>
    %53 = vector.shape_cast %52 : vector<128xf32> to vector<1x128xf32>
    %c0_28 = arith.constant 0 : index
    %c0_29 = arith.constant 0 : index
    %c0_30 = arith.constant 0 : index
    %c0_31 = arith.constant 0 : index
    %54 = vector.load %arg13[%c0_28, %c0_29, %c0_30, %c0_31] : memref<1x1x1x128xf32, #tpu.memory_space<vmem>>, vector<1x1x1x128xf32>
    %55 = vector.shape_cast %54 : vector<1x1x1x128xf32> to vector<1x128xf32>
    %56 = vector.shape_cast %53 : vector<1x128xf32> to vector<1x1x1x128xf32>
    tpu.vector_store %arg13[%c0_28, %c0_29, %c0_30, %c0_31], %56 {strides = array<i32>} : memref<1x1x1x128xf32, #tpu.memory_space<vmem>>, vector<1x1x1x128xf32>,
    %cst_32 = arith.constant dense<0.000000e+00> : vector<32x128xf32>
    %57 = tpu.matmul %17, %41, %cst_32 {dimension_numbers = #tpu.dot_dimension_numbers<[1], [0], [0], [1], [0, 0, 1, 1], [], []>} : vector<32x8xf32>, vector<8x128xf32>, vector<32x128xf32> -> vector<32x128xf32>
    %58 = vector.broadcast %20 : vector<32x1xf32> to vector<32x128xf32>
    %59 = arith.addf %57, %58 : vector<32x128xf32>
    %60 = arith.subf %21, %59 : vector<32x128xf32>
    %c0_33 = arith.constant 0 : index
    %c0_34 = arith.constant 0 : index
    %61 = vector.load %arg14[%c0_33, %c0_34] : memref<32x128xf32, #tpu.memory_space<vmem>>, vector<32x128xf32>
    tpu.vector_store %arg14[%c0_33, %c0_34], %60 {strides = array<i32>} : memref<32x128xf32, #tpu.memory_space<vmem>>, vector<32x128xf32>,
    %c3_i32 = arith.constant 3 : i32
    %62 = arith.cmpi eq, %arg2, %c3_i32 : i32
    %63 = arith.extui %62 : i1 to i32
    %c0_i32_35 = arith.constant 0 : i32
    %64 = arith.cmpi ne, %63, %c0_i32_35 : i32
    scf.if %64 {
      %c0_36 = arith.constant 0 : index
      %c0_37 = arith.constant 0 : index
      %c0_38 = arith.constant 0 : index
      %65 = vector.load %arg3[%c0_36, %c0_37, %c0_38] : memref<1x32x128xf32, #tpu.memory_space<vmem>>, vector<1x32x128xf32>
      %66 = vector.shape_cast %65 : vector<1x32x128xf32> to vector<32x128xf32>
      %c0_39 = arith.constant 0 : index
      %c0_40 = arith.constant 0 : index
      %67 = vector.load %arg14[%c0_39, %c0_40] : memref<32x128xf32, #tpu.memory_space<vmem>>, vector<32x128xf32>
      %68 = arith.subf %66, %67 : vector<32x128xf32>
      %c0_41 = arith.constant 0 : index
      %c0_42 = arith.constant 0 : index
      %c0_43 = arith.constant 0 : index
      %69 = vector.load %arg10[%c0_41, %c0_42, %c0_43] : memref<1x32x128xf32, #tpu.memory_space<vmem>>, vector<1x32x128xf32>
      %70 = vector.shape_cast %69 : vector<1x32x128xf32> to vector<32x128xf32>
      %71 = vector.shape_cast %68 : vector<32x128xf32> to vector<1x32x128xf32>
      tpu.vector_store %arg10[%c0_41, %c0_42, %c0_43], %71 {strides = array<i32>} : memref<1x32x128xf32, #tpu.memory_space<vmem>>, vector<1x32x128xf32>,
    } else {
    }
    return
  }
  func.func @transform_0(%arg0: i32, %arg1: i32, %arg2: i32) -> (i32, i32, i32) {
    %c0_i32 = arith.constant 0 : i32
    %c0_i32_0 = arith.constant 0 : i32
    return %arg0, %c0_i32, %arg1 : i32, i32, i32
  }
  func.func @transform_1(%arg0: i32, %arg1: i32, %arg2: i32) -> (i32, i32, i32) {
    %c0_i32 = arith.constant 0 : i32
    %c0_i32_0 = arith.constant 0 : i32
    %c0_i32_1 = arith.constant 0 : i32
    %c0_i32_2 = arith.constant 0 : i32
    return %c0_i32, %c0_i32_0, %c0_i32_1 : i32, i32, i32
  }
  func.func @transform_2(%arg0: i32, %arg1: i32, %arg2: i32) -> (i32, i32, i32) {
    %c0_i32 = arith.constant 0 : i32
    %c0_i32_0 = arith.constant 0 : i32
    %c0_i32_1 = arith.constant 0 : i32
    %c0_i32_2 = arith.constant 0 : i32
    return %c0_i32, %c0_i32_0, %c0_i32_1 : i32, i32, i32
  }
  func.func @transform_3(%arg0: i32, %arg1: i32, %arg2: i32) -> (i32, i32, i32) {
    %c0_i32 = arith.constant 0 : i32
    %c0_i32_0 = arith.constant 0 : i32
    %c0_i32_1 = arith.constant 0 : i32
    %c0_i32_2 = arith.constant 0 : i32
    return %c0_i32, %c0_i32_0, %c0_i32_1 : i32, i32, i32
  }
  func.func @transform_4(%arg0: i32, %arg1: i32, %arg2: i32) -> (i32, i32, i32) {
    %c0_i32 = arith.constant 0 : i32
    %c0_i32_0 = arith.constant 0 : i32
    %c0_i32_1 = arith.constant 0 : i32
    %c0_i32_2 = arith.constant 0 : i32
    return %c0_i32, %c0_i32_0, %c0_i32_1 : i32, i32, i32
  }
  func.func @transform_5(%arg0: i32, %arg1: i32, %arg2: i32) -> (i32, i32, i32) {
    %c0_i32 = arith.constant 0 : i32
    %c0_i32_0 = arith.constant 0 : i32
    %c0_i32_1 = arith.constant 0 : i32
    %c0_i32_2 = arith.constant 0 : i32
    return %c0_i32, %c0_i32_0, %c0_i32_1 : i32, i32, i32
  }
  func.func @transform_6(%arg0: i32, %arg1: i32, %arg2: i32) -> (i32, i32, i32) {
    %c0_i32 = arith.constant 0 : i32
    %c0_i32_0 = arith.constant 0 : i32
    %c0_i32_1 = arith.constant 0 : i32
    %c0_i32_2 = arith.constant 0 : i32
    return %c0_i32, %c0_i32_0, %c0_i32_1 : i32, i32, i32
  }
  func.func @transform_7(%arg0: i32, %arg1: i32, %arg2: i32) -> (i32, i32, i32) {
    %c0_i32 = arith.constant 0 : i32
    %c0_i32_0 = arith.constant 0 : i32
    return %arg0, %c0_i32, %arg1 : i32, i32, i32
  }
  func.func @transform_8(%arg0: i32, %arg1: i32, %arg2: i32) -> (i32, i32, i32, i32) {
    %c0_i32 = arith.constant 0 : i32
    %c0_i32_0 = arith.constant 0 : i32
    return %arg2, %arg0, %c0_i32, %arg1 : i32, i32, i32, i32
  }
  func.func @transform_9(%arg0: i32, %arg1: i32, %arg2: i32) -> (i32, i32, i32, i32) {
    %c0_i32 = arith.constant 0 : i32
    %c0_i32_0 = arith.constant 0 : i32
    return %arg2, %arg0, %c0_i32, %arg1 : i32, i32, i32, i32
  }
  func.func @transform_10(%arg0: i32, %arg1: i32, %arg2: i32) -> (i32, i32, i32, i32) {
    %c0_i32 = arith.constant 0 : i32
    %c0_i32_0 = arith.constant 0 : i32
    return %arg2, %arg0, %c0_i32, %arg1 : i32, i32, i32, i32
  }
}

</mosaic_0001>

<llo_original>
// kernel: tpu_custom_call.1
$region0: #{tpu_custom_call.1}
  #allocation0 [shape = 'u32[]', space=smem, size = 0x4, offset = 0x4, fixed_abs, tag = 'smem constant byte address 0x4 - core index']
  #allocation1 [shape = 'u32[144,128]{1,0:T(1,128)}', space=vmem, size = 0x12000, scoped, tag = 'internal scratch']
  #allocation2 [shape = 'f32[32,128]{1,0:T(8,128)}', space=vmem, size = 0x4000, scoped, tag = 'scratch operand']
  %s0 = inlined_call_operand.vmem [shape: f32[2,32,256], index: 0, kind: input, shape index: {}]
  %s1 = inlined_call_operand.vmem [shape: f32[4,8,32], index: 1, kind: input, shape index: {}]
  %s2 = inlined_call_operand.vmem [shape: f32[4,8,1], index: 2, kind: input, shape index: {}]
  %s3 = inlined_call_operand.vmem [shape: f32[4,64,8], index: 3, kind: input, shape index: {}]
  %s4 = inlined_call_operand.vmem [shape: f32[4,16,64], index: 4, kind: input, shape index: {}]
  %s5 = inlined_call_operand.vmem [shape: f32[4,32,8], index: 5, kind: input, shape index: {}]
  %s6 = inlined_call_operand.vmem [shape: f32[4,32,1], index: 6, kind: input, shape index: {}]
  %s7 = inlined_call_operand.hbm [shape: f32[2,32,256], index: 7, kind: output, shape index: {0}]
  %s8 = inlined_call_operand.hbm [shape: s32[4,2,1,256], index: 8, kind: output, shape index: {1}]
  %s9 = inlined_call_operand.hbm [shape: f32[4,2,8,256], index: 9, kind: output, shape index: {2}]
  %s10 = inlined_call_operand.hbm [shape: f32[4,2,1,256], index: 10, kind: output, shape index: {3}]
  %11 = xla_tuple %s7, %s8, %s9, %s10
  %s12 = sld [smem:[#allocation0]]
  $region131: #{tpu_custom_call.1} parent=0
    _
  %s14 = ssub.s32 1, %s12
  %s15 = scalar_select 0, %s14, %s12
  $region1: #{tpu_custom_call.1} parent=0
    #allocation3 [shape = 'u8[32768]{0}', space=vmem, size = 0x8000, scoped, tag = 'input window, operand 0']
    #allocation4 [shape = 'u8[32768]{0}', space=vmem, size = 0x8000, scoped, tag = 'output window, operand 0']
    #allocation5 [shape = 's32[2]{0}', space=sflag, size = 0x8, scoped, tag = 'scoped memory for tpu_custom_call.1']
    #allocation6 [shape = 'u8[1024]{0}', space=vmem, size = 0x400, scoped, tag = 'output window, operand 1']
    #allocation7 [shape = 's32[2]{0}', space=sflag, size = 0x8, scoped, tag = 'scoped memory for tpu_custom_call.1']
    #allocation8 [shape = 'u8[8192]{0}', space=vmem, size = 0x2000, scoped, tag = 'output window, operand 2']
    #allocation9 [shape = 'u8[1024]{0}', space=vmem, size = 0x400, scoped, tag = 'output window, operand 3']
    #allocation10 [shape = 's32[2]{0}', space=sflag, size = 0x8, scoped, tag = 'scoped memory for tpu_custom_call.1']
    %16 = vsyncpa [#allocation5], 0
    %s17 = scalar_lea.sflag [#allocation5], 1
    %18 = vsyncpa %s17, 0
    %19 = vsyncpa [#allocation7], 0
    %s20 = scalar_lea.sflag [#allocation7], 1
    %21 = vsyncpa %s20, 0
    %22 = vsyncpa [#allocation10], 0
    %s23 = scalar_lea.sflag [#allocation10], 1
    %24 = vsyncpa %s23, 0
    loop: start=0, step=1, limit=18
    $region2: #{tpu_custom_call.1} parent=1 // loop_pre_header
      _
    $region3: #{tpu_custom_call.1} parent=1 // loop_header
      %s26 = sphi 0, %s30
      %p27 = scmp.ge.s32.totalorder %s26, 18
      %s33 = sphi 0, %s52
      %s34 = sphi 0, %s48
      %s35 = sphi 0, %s44
      %s36 = sphi 0, %s33
      %s37 = sphi 0, %s34
      %s38 = sphi 0, %s35
      %s39 = sphi 0, %s36
      %s40 = sphi 0, %s37
      %s41 = sphi 0, %s38
      %s57 = sphi 0, %s59
      %s60 = sphi 0, %s57
      %s61 = sphi 0, %s60
      %s77 = sphi 0, %s61
      %s81 = sphi 0, %s81
      %s83 = sphi 0, %s81
      %s84 = sphi 0, %s83
      %s98 = sphi 0, %s84
      %s102 = sphi 0, %s102
      %s104 = sphi 0, %s102
      %s105 = sphi 0, %s104
      %s119 = sphi 0, %s105
      %s123 = sphi 0, %s123
      %s125 = sphi 0, %s123
      %s126 = sphi 0, %s125
      %s140 = sphi 0, %s126
      %s144 = sphi 0, %s144
      %s146 = sphi 0, %s144
      %s147 = sphi 0, %s146
      %s161 = sphi 0, %s147
      %s165 = sphi 0, %s165
      %s167 = sphi 0, %s165
      %s168 = sphi 0, %s167
      %s182 = sphi 0, %s168
      %s186 = sphi 0, %s186
      %s188 = sphi 0, %s186
      %s189 = sphi 0, %s188
      %s203 = sphi 0, %s189
      %s211 = sphi 0, %s213
      %s214 = sphi 0, %s211
      %s215 = sphi 0, %s214
      %s231 = sphi 0, %s215
      %s241 = sphi 0, %s243
      %s244 = sphi 0, %s241
      %s245 = sphi 0, %s244
      %s261 = sphi 0, %s245
      %s271 = sphi 0, %s273
      %s274 = sphi 0, %s271
      %s275 = sphi 0, %s274
      %s291 = sphi 0, %s275
      %s301 = sphi 0, %s303
      %s304 = sphi 0, %s301
      %s305 = sphi 0, %s304
      %s321 = sphi 0, %s305
    $region4: #{tpu_custom_call.1} parent=1 // loop_header_branch
      %29 = sbr.rel (%p27) target = $region8
    $region5: #{tpu_custom_call.1} parent=1 // loop_body
      %s31 = ssub.s32 %s26, 1
      %s32 = ssub.s32 %s26, 2
      %s42 = sadd.s32 1, %s35
      %p43 = scmp.ge.s32.totalorder %s42, 4
      %s44 = scalar_select %p43, 0, %s42
      %s45 = sadd.s32 1, %s34
      %s46 = scalar_select %p43, %s45, %s34
      %p47 = scmp.ge.s32.totalorder %s46, 2
      %s48 = scalar_select %p47, 0, %s46
      %s49 = sadd.s32 1, %s33
      %s50 = scalar_select %p47, %s49, %s33
      %p51 = scmp.ge.s32.totalorder %s50, 2
      %s52 = scalar_select %p51, 0, %s50
      %s53 = ssub.s32 %s33, %s52
      %s54 = ssub.s32 %s34, %s48
      %s55 = sor.u32 %s53, %s54
      %p56 = scmp.eq.s32.totalorder %s55, 0
      %s58 = sadd.s32 %s57, 1
      %s59 = scalar_select %p56, %s57, %s58
      %p62 = pneg %p56
      %p63 = scmp.eq.s32.totalorder %s26, 15
      %p64 = por %p62, %p63
      %p65 = scmp.ne.s32.totalorder %s57, %s60
      %p66 = scmp.eq.s32.totalorder %s26, 0
      %p67 = por %p65, %p66
      %p68 = scmp.ne.s32.totalorder %s57, %s60
      %p69 = scmp.eq.s32.totalorder %s31, 15
      %p70 = por %p68, %p69
      %p71 = scmp.ne.s32.totalorder %s60, %s61
      %p72 = scmp.eq.s32.totalorder %s31, 0
      %p73 = por %p71, %p72
      %p74 = scmp.ne.s32.totalorder %s60, %s61
      %p75 = scmp.eq.s32.totalorder %s32, 15
      %p76 = por %p74, %p75
      %p78 = scmp.ne.s32.totalorder %s61, %s77
      %p79 = scmp.eq.s32.totalorder %s32, 0
      %p80 = por %p78, %p79
      %s82 = sadd.s32 %s81, 1
      %p85 = scmp.eq.s32.totalorder %s26, 15
      %p86 = scmp.ne.s32.totalorder %s81, %s83
      %p87 = scmp.eq.s32.totalorder %s26, 0
      %p88 = por %p86, %p87
      %p89 = scmp.ne.s32.totalorder %s81, %s83
      %p90 = scmp.eq.s32.totalorder %s31, 15
      %p91 = por %p89, %p90
      %p92 = scmp.ne.s32.totalorder %s83, %s84
      %p93 = scmp.eq.s32.totalorder %s31, 0
      %p94 = por %p92, %p93
      %p95 = scmp.ne.s32.totalorder %s83, %s84
      %p96 = scmp.eq.s32.totalorder %s32, 15
      %p97 = por %p95, %p96
      %p99 = scmp.ne.s32.totalorder %s84, %s98
      %p100 = scmp.eq.s32.totalorder %s32, 0
      %p101 = por %p99, %p100
      %s103 = sadd.s32 %s102, 1
      %p106 = scmp.eq.s32.totalorder %s26, 15
      %p107 = scmp.ne.s32.totalorder %s102, %s104
      %p108 = scmp.eq.s32.totalorder %s26, 0
      %p109 = por %p107, %p108
      %p110 = scmp.ne.s32.totalorder %s102, %s104
      %p111 = scmp.eq.s32.totalorder %s31, 15
      %p112 = por %p110, %p111
      %p113 = scmp.ne.s32.totalorder %s104, %s105
      %p114 = scmp.eq.s32.totalorder %s31, 0
      %p115 = por %p113, %p114
      %p116 = scmp.ne.s32.totalorder %s104, %s105
      %p117 = scmp.eq.s32.totalorder %s32, 15
      %p118 = por %p116, %p117
      %p120 = scmp.ne.s32.totalorder %s105, %s119
      %p121 = scmp.eq.s32.totalorder %s32, 0
      %p122 = por %p120, %p121
      %s124 = sadd.s32 %s123, 1
      %p127 = scmp.eq.s32.totalorder %s26, 15
      %p128 = scmp.ne.s32.totalorder %s123, %s125
      %p129 = scmp.eq.s32.totalorder %s26, 0
      %p130 = por %p128, %p129
      %p131 = scmp.ne.s32.totalorder %s123, %s125
      %p132 = scmp.eq.s32.totalorder %s31, 15
      %p133 = por %p131, %p132
      %p134 = scmp.ne.s32.totalorder %s125, %s126
      %p135 = scmp.eq.s32.totalorder %s31, 0
      %p136 = por %p134, %p135
      %p137 = scmp.ne.s32.totalorder %s125, %s126
      %p138 = scmp.eq.s32.totalorder %s32, 15
      %p139 = por %p137, %p138
      %p141 = scmp.ne.s32.totalorder %s126, %s140
      %p142 = scmp.eq.s32.totalorder %s32, 0
      %p143 = por %p141, %p142
      %s145 = sadd.s32 %s144, 1
      %p148 = scmp.eq.s32.totalorder %s26, 15
      %p149 = scmp.ne.s32.totalorder %s144, %s146
      %p150 = scmp.eq.s32.totalorder %s26, 0
      %p151 = por %p149, %p150
      %p152 = scmp.ne.s32.totalorder %s144, %s146
      %p153 = scmp.eq.s32.totalorder %s31, 15
      %p154 = por %p152, %p153
      %p155 = scmp.ne.s32.totalorder %s146, %s147
      %p156 = scmp.eq.s32.totalorder %s31, 0
      %p157 = por %p155, %p156
      %p158 = scmp.ne.s32.totalorder %s146, %s147
      %p159 = scmp.eq.s32.totalorder %s32, 15
      %p160 = por %p158, %p159
      %p162 = scmp.ne.s32.totalorder %s147, %s161
      %p163 = scmp.eq.s32.totalorder %s32, 0
      %p164 = por %p162, %p163
      %s166 = sadd.s32 %s165, 1
      %p169 = scmp.eq.s32.totalorder %s26, 15
      %p170 = scmp.ne.s32.totalorder %s165, %s167
      %p171 = scmp.eq.s32.totalorder %s26, 0
      %p172 = por %p170, %p171
      %p173 = scmp.ne.s32.totalorder %s165, %s167
      %p174 = scmp.eq.s32.totalorder %s31, 15
      %p175 = por %p173, %p174
      %p176 = scmp.ne.s32.totalorder %s167, %s168
      %p177 = scmp.eq.s32.totalorder %s31, 0
      %p178 = por %p176, %p177
      %p179 = scmp.ne.s32.totalorder %s167, %s168
      %p180 = scmp.eq.s32.totalorder %s32, 15
      %p181 = por %p179, %p180
      %p183 = scmp.ne.s32.totalorder %s168, %s182
      %p184 = scmp.eq.s32.totalorder %s32, 0
      %p185 = por %p183, %p184
      %s187 = sadd.s32 %s186, 1
      %p190 = scmp.eq.s32.totalorder %s26, 15
      %p191 = scmp.ne.s32.totalorder %s186, %s188
      %p192 = scmp.eq.s32.totalorder %s26, 0
      %p193 = por %p191, %p192
      %p194 = scmp.ne.s32.totalorder %s186, %s188
      %p195 = scmp.eq.s32.totalorder %s31, 15
      %p196 = por %p194, %p195
      %p197 = scmp.ne.s32.totalorder %s188, %s189
      %p198 = scmp.eq.s32.totalorder %s31, 0
      %p199 = por %p197, %p198
      %p200 = scmp.ne.s32.totalorder %s188, %s189
      %p201 = scmp.eq.s32.totalorder %s32, 15
      %p202 = por %p200, %p201
      %p204 = scmp.ne.s32.totalorder %s189, %s203
      %p205 = scmp.eq.s32.totalorder %s32, 0
      %p206 = por %p204, %p205
      %s207 = ssub.s32 %s33, %s52
      %s208 = ssub.s32 %s34, %s48
      %s209 = sor.u32 %s207, %s208
      %p210 = scmp.eq.s32.totalorder %s209, 0
      %s212 = sadd.s32 %s211, 1
      %s213 = scalar_select %p210, %s211, %s212
      %p216 = pneg %p210
      %p217 = scmp.eq.s32.totalorder %s26, 15
      %p218 = por %p216, %p217
      %p219 = scmp.ne.s32.totalorder %s211, %s214
      %p220 = scmp.eq.s32.totalorder %s26, 0
      %p221 = por %p219, %p220
      %p222 = scmp.ne.s32.totalorder %s211, %s214
      %p223 = scmp.eq.s32.totalorder %s31, 15
      %p224 = por %p222, %p223
      %p225 = scmp.ne.s32.totalorder %s214, %s215
      %p226 = scmp.eq.s32.totalorder %s31, 0
      %p227 = por %p225, %p226
      %p228 = scmp.ne.s32.totalorder %s214, %s215
      %p229 = scmp.eq.s32.totalorder %s32, 15
      %p230 = por %p228, %p229
      %p232 = scmp.ne.s32.totalorder %s215, %s231
      %p233 = scmp.eq.s32.totalorder %s32, 0
      %p234 = por %p232, %p233
      %s235 = ssub.s32 %s35, %s44
      %s236 = ssub.s32 %s33, %s52
      %s237 = sor.u32 %s235, %s236
      %s238 = ssub.s32 %s34, %s48
      %s239 = sor.u32 %s237, %s238
      %p240 = scmp.eq.s32.totalorder %s239, 0
      %s242 = sadd.s32 %s241, 1
      %s243 = scalar_select %p240, %s241, %s242
      %p246 = pneg %p240
      %p247 = scmp.eq.s32.totalorder %s26, 15
      %p248 = por %p246, %p247
      %p249 = scmp.ne.s32.totalorder %s241, %s244
      %p250 = scmp.eq.s32.totalorder %s26, 0
      %p251 = por %p249, %p250
      %p252 = scmp.ne.s32.totalorder %s241, %s244
      %p253 = scmp.eq.s32.totalorder %s31, 15
      %p254 = por %p252, %p253
      %p255 = scmp.ne.s32.totalorder %s244, %s245
      %p256 = scmp.eq.s32.totalorder %s31, 0
      %p257 = por %p255, %p256
      %p258 = scmp.ne.s32.totalorder %s244, %s245
      %p259 = scmp.eq.s32.totalorder %s32, 15
      %p260 = por %p258, %p259
      %p262 = scmp.ne.s32.totalorder %s245, %s261
      %p263 = scmp.eq.s32.totalorder %s32, 0
      %p264 = por %p262, %p263
      %s265 = ssub.s32 %s35, %s44
      %s266 = ssub.s32 %s33, %s52
      %s267 = sor.u32 %s265, %s266
      %s268 = ssub.s32 %s34, %s48
      %s269 = sor.u32 %s267, %s268
      %p270 = scmp.eq.s32.totalorder %s269, 0
      %s272 = sadd.s32 %s271, 1
      %s273 = scalar_select %p270, %s271, %s272
      %p276 = pneg %p270
      %p277 = scmp.eq.s32.totalorder %s26, 15
      %p278 = por %p276, %p277
      %p279 = scmp.ne.s32.totalorder %s271, %s274
      %p280 = scmp.eq.s32.totalorder %s26, 0
      %p281 = por %p279, %p280
      %p282 = scmp.ne.s32.totalorder %s271, %s274
      %p283 = scmp.eq.s32.totalorder %s31, 15
      %p284 = por %p282, %p283
      %p285 = scmp.ne.s32.totalorder %s274, %s275
      %p286 = scmp.eq.s32.totalorder %s31, 0
      %p287 = por %p285, %p286
      %p288 = scmp.ne.s32.totalorder %s274, %s275
      %p289 = scmp.eq.s32.totalorder %s32, 15
      %p290 = por %p288, %p289
      %p292 = scmp.ne.s32.totalorder %s275, %s291
      %p293 = scmp.eq.s32.totalorder %s32, 0
      %p294 = por %p292, %p293
      %s295 = ssub.s32 %s35, %s44
      %s296 = ssub.s32 %s33, %s52
      %s297 = sor.u32 %s295, %s296
      %s298 = ssub.s32 %s34, %s48
      %s299 = sor.u32 %s297, %s298
      %p300 = scmp.eq.s32.totalorder %s299, 0
      %s302 = sadd.s32 %s301, 1
      %s303 = scalar_select %p300, %s301, %s302
      %p306 = pneg %p300
      %p307 = scmp.eq.s32.totalorder %s26, 15
      %p308 = por %p306, %p307
      %p309 = scmp.ne.s32.totalorder %s301, %s304
      %p310 = scmp.eq.s32.totalorder %s26, 0
      %p311 = por %p309, %p310
      %p312 = scmp.ne.s32.totalorder %s301, %s304
      %p313 = scmp.eq.s32.totalorder %s31, 15
      %p314 = por %p312, %p313
      %p315 = scmp.ne.s32.totalorder %s304, %s305
      %p316 = scmp.eq.s32.totalorder %s31, 0
      %p317 = por %p315, %p316
      %p318 = scmp.ne.s32.totalorder %s304, %s305
      %p319 = scmp.eq.s32.totalorder %s32, 15
      %p320 = por %p318, %p319
      %p322 = scmp.ne.s32.totalorder %s305, %s321
      %p323 = scmp.eq.s32.totalorder %s32, 0
      %p324 = por %p322, %p323
      %p325 = scmp.le.s32.totalorder 1, %s26
      %p326 = scmp.lt.s32.totalorder %s26, 17
      %p327 = pnand %p325, %p326
      %p328 = pneg %p327
      // Predicated region
      $region9: #{tpu_custom_call.1} parent=5 // pred_check
        _
      $region10: #{tpu_custom_call.1} parent=5 // pred_check_branch
        %330 = sbr.rel (%p327) target = $region12
      $region11: #{tpu_custom_call.1} parent=5 // pred_region
        %s331 = ssub.s32 %s26, 1
        // Predicated region
        $region13: #{tpu_custom_call.1} parent=11 // pred_check
          %p332 = pneg %p94
        $region14: #{tpu_custom_call.1} parent=11 // pred_check_branch
          %334 = sbr.rel (%p332) target = $region16
        $region15: #{tpu_custom_call.1} parent=11 // pred_region
          _
        $region16: #{tpu_custom_call.1} parent=11 // pred_fallthru
          _
        // Predicated region
        $region17: #{tpu_custom_call.1} parent=11 // pred_check
          %p335 = pneg %p115
        $region18: #{tpu_custom_call.1} parent=11 // pred_check_branch
          %337 = sbr.rel (%p335) target = $region20
        $region19: #{tpu_custom_call.1} parent=11 // pred_region
          _
        $region20: #{tpu_custom_call.1} parent=11 // pred_fallthru
          _
        // Predicated region
        $region21: #{tpu_custom_call.1} parent=11 // pred_check
          %p338 = pneg %p136
        $region22: #{tpu_custom_call.1} parent=11 // pred_check_branch
          %340 = sbr.rel (%p338) target = $region24
        $region23: #{tpu_custom_call.1} parent=11 // pred_region
          _
        $region24: #{tpu_custom_call.1} parent=11 // pred_fallthru
          _
        // Predicated region
        $region25: #{tpu_custom_call.1} parent=11 // pred_check
          %p341 = pneg %p157
        $region26: #{tpu_custom_call.1} parent=11 // pred_check_branch
          %343 = sbr.rel (%p341) target = $region28
        $region27: #{tpu_custom_call.1} parent=11 // pred_region
          _
        $region28: #{tpu_custom_call.1} parent=11 // pred_fallthru
          _
        // Predicated region
        $region29: #{tpu_custom_call.1} parent=11 // pred_check
          %p344 = pneg %p178
        $region30: #{tpu_custom_call.1} parent=11 // pred_check_branch
          %346 = sbr.rel (%p344) target = $region32
        $region31: #{tpu_custom_call.1} parent=11 // pred_region
          _
        $region32: #{tpu_custom_call.1} parent=11 // pred_fallthru
          _
        // Predicated region
        $region33: #{tpu_custom_call.1} parent=11 // pred_check
          %p347 = pneg %p199
        $region34: #{tpu_custom_call.1} parent=11 // pred_check_branch
          %349 = sbr.rel (%p347) target = $region36
        $region35: #{tpu_custom_call.1} parent=11 // pred_region
          _
        $region36: #{tpu_custom_call.1} parent=11 // pred_fallthru
          _
      $region12: #{tpu_custom_call.1} parent=5 // pred_fallthru
        _
      %p350 = scmp.lt.s32.totalorder %s26, 16
      // Predicated region
      $region37: #{tpu_custom_call.1} parent=5 // pred_check
        %p351 = pneg %p350
      $region38: #{tpu_custom_call.1} parent=5 // pred_check_branch
        %353 = sbr.rel (%p351) target = $region40
      $region39: #{tpu_custom_call.1} parent=5 // pred_region
        // Predicated region
        $region41: #{tpu_custom_call.1} parent=39 // pred_check
          %p354 = pneg %p67
        $region42: #{tpu_custom_call.1} parent=39 // pred_check_branch
          %356 = sbr.rel (%p354) target = $region44
        $region43: #{tpu_custom_call.1} parent=39 // pred_region
          %s357 = sand.u32 %s57, 1
          %s358 = sand.u32 %s57, 1
          %s359 = smul.addr %s358, 32
          %s360 = scalar_lea.vmem [#allocation3], %s359
          %s361 = smul.addr %s33, 8
          %s362 = sadd.s32 %s34, %s361
          %s363 = smul.addr %s362, 8
          %s364 = scalar_lea.vmem %s0, %s363
          // Predicated region
          $region45: #{tpu_custom_call.1} parent=43 // pred_check
            _
          $region46: #{tpu_custom_call.1} parent=43 // pred_check_branch
            %366 = sbr.rel (0) target = $region48
          $region47: #{tpu_custom_call.1} parent=43 // pred_region
            // Predicated region
            $region49: #{tpu_custom_call.1} parent=47 // pred_check
              _
            $region50: #{tpu_custom_call.1} parent=47 // pred_check_branch
              %368 = sbr.rel (0) target = $region52
            $region51: #{tpu_custom_call.1} parent=47 // pred_region
              // Predicated region
              $region64: #{tpu_custom_call.1} parent=51 // pred_check
                _
              $region65: #{tpu_custom_call.1} parent=51 // pred_check_branch
                %389 = sbr.rel (0) target = $region67
              $region66: #{tpu_custom_call.1} parent=51 // pred_region
                loop: start=0, step=1, limit=1
                $region68: #{tpu_custom_call.1} parent=66 // loop_pre_header
                  _
                $region69: #{tpu_custom_call.1} parent=66 // loop_header
                  %s391 = sphi 0, %s395
                  %p392 = scmp.ge.s32.totalorder %s391, 1
                  %s396 = sphi %s364, %s364
                  %s397 = sphi %s360, %s360
                $region70: #{tpu_custom_call.1} parent=66 // loop_header_branch
                  %394 = sbr.rel (%p392) target = $region74
                $region71: #{tpu_custom_call.1} parent=66 // loop_body
                  %v398 = vld [vmem:[%s396] sm:$0xff]
                  %399 = vst [vmem:[%s397] sm:$0xff] %v398
                  %v400 = vld [vmem:[%s396 + $0x10] sm:$0xff]
                  %401 = vst [vmem:[%s397 + $0x8] sm:$0xff] %v400
                  %v402 = vld [vmem:[%s396 + $0x20] sm:$0xff]
                  %403 = vst [vmem:[%s397 + $0x10] sm:$0xff] %v402
                  %v404 = vld [vmem:[%s396 + $0x30] sm:$0xff]
                  %405 = vst [vmem:[%s397 + $0x18] sm:$0xff] %v404
                $region72: #{tpu_custom_call.1} parent=66 // loop_footer
                  %s395 = sadd.s32 1, %s391
                $region73: #{tpu_custom_call.1} parent=66 // loop_footer_branch
                  %390 = sbr.rel target = $region69
                $region74: #{tpu_custom_call.1} parent=66 // loop_exit
                  _
              $region67: #{tpu_custom_call.1} parent=51 // pred_fallthru
                _
              // Predicated region
              $region75: #{tpu_custom_call.1} parent=51 // pred_check
                _
              $region76: #{tpu_custom_call.1} parent=51 // pred_check_branch
                %407 = sbr.rel target = $region78
              $region77: #{tpu_custom_call.1} parent=51 // pred_region
                _
              $region78: #{tpu_custom_call.1} parent=51 // pred_fallthru
                _
            $region52: #{tpu_custom_call.1} parent=47 // pred_fallthru
              _
            // Predicated region
            $region53: #{tpu_custom_call.1} parent=47 // pred_check
              _
            $region54: #{tpu_custom_call.1} parent=47 // pred_check_branch
              %370 = sbr.rel target = $region56
            $region55: #{tpu_custom_call.1} parent=47 // pred_region
              loop: start=0, step=1, limit=1
              $region57: #{tpu_custom_call.1} parent=55 // loop_pre_header
                _
              $region58: #{tpu_custom_call.1} parent=55 // loop_header
                %s373 = sphi 0, %s377
                %p374 = scmp.ge.s32.totalorder %s373, 1
                %s378 = sphi %s364, %s364
                %s379 = sphi %s360, %s360
              $region59: #{tpu_custom_call.1} parent=55 // loop_header_branch
                %376 = sbr.rel (%p374) target = $region63
              $region60: #{tpu_custom_call.1} parent=55 // loop_body
                %v380 = vld [vmem:[%s378] sm:$0xff]
                %381 = vst [vmem:[%s379] sm:$0xff] %v380
                %v382 = vld [vmem:[%s378 + $0x10] sm:$0xff]
                %383 = vst [vmem:[%s379 + $0x8] sm:$0xff] %v382
                %v384 = vld [vmem:[%s378 + $0x20] sm:$0xff]
                %385 = vst [vmem:[%s379 + $0x10] sm:$0xff] %v384
                %v386 = vld [vmem:[%s378 + $0x30] sm:$0xff]
                %387 = vst [vmem:[%s379 + $0x18] sm:$0xff] %v386
              $region61: #{tpu_custom_call.1} parent=55 // loop_footer
                %s377 = sadd.s32 1, %s373
              $region62: #{tpu_custom_call.1} parent=55 // loop_footer_branch
                %372 = sbr.rel target = $region58
              $region63: #{tpu_custom_call.1} parent=55 // loop_exit
                _
            $region56: #{tpu_custom_call.1} parent=47 // pred_fallthru
              _
          $region48: #{tpu_custom_call.1} parent=43 // pred_fallthru
            _
          %408 = vnop
        $region44: #{tpu_custom_call.1} parent=39 // pred_fallthru
          _
      $region40: #{tpu_custom_call.1} parent=5 // pred_fallthru
        _
      %p409 = scmp.le.s32.totalorder 1, %s26
      %p410 = scmp.lt.s32.totalorder %s26, 17
      %p411 = pnand %p409, %p410
      %p412 = pneg %p411
      // Predicated region
      $region79: #{tpu_custom_call.1} parent=5 // pred_check
        _
      $region80: #{tpu_custom_call.1} parent=5 // pred_check_branch
        %414 = sbr.rel (%p411) target = $region82
      $region81: #{tpu_custom_call.1} parent=5 // pred_region
        %s415 = ssub.s32 %s26, 1
        %s416 = sand.u32 %s60, 1
        %s417 = sand.u32 %s60, 1
        %s418 = smul.addr %s417, 32
        %s419 = scalar_lea.vmem [#allocation3], %s418
        // Predicated region
        $region83: #{tpu_custom_call.1} parent=81 // pred_check
          %p420 = pneg %p73
        $region84: #{tpu_custom_call.1} parent=81 // pred_check_branch
          %422 = sbr.rel (%p420) target = $region86
        $region85: #{tpu_custom_call.1} parent=81 // pred_region
          _
        $region86: #{tpu_custom_call.1} parent=81 // pred_fallthru
          _
        %s423 = sand.u32 %s60, 1
        %s424 = sand.u32 %s60, 1
        %s425 = smul.addr %s424, 32
        %s426 = scalar_lea.vmem [#allocation3], %s425
        %p427 = pneg %p73
        %p428 = pneg %p70
        %p429 = pneg %p94
        %p430 = pneg %p91
        %p431 = pneg %p115
        %p432 = pneg %p112
        %p433 = pneg %p136
        %p434 = pneg %p133
        %p435 = pneg %p157
        %p436 = pneg %p154
        %p437 = pneg %p178
        %p438 = pneg %p175
        %p439 = pneg %p199
        %p440 = pneg %p196
        %p441 = pneg %p227
        %p442 = pneg %p224
        %s443 = sand.u32 %s214, 1
        %s444 = scalar_lea.sflag [#allocation5], %s443
        %s445 = sand.u32 %s214, 1
        %s446 = smul.addr %s445, 32
        %s447 = scalar_lea.vmem [#allocation4], %s446
        %p448 = pneg %p257
        %p449 = pneg %p254
        %s450 = sand.u32 %s31, 1
        %s451 = scalar_lea.sflag [#allocation7], %s450
        %s452 = sand.u32 %s244, 1
        %s453 = scalar_lea.vmem [#allocation6], %s452
        %p454 = pneg %p287
        %p455 = pneg %p284
        %s456 = sand.u32 %s31, 1
        %s457 = scalar_lea.sflag [#allocation7], %s456
        %s458 = sand.u32 %s274, 1
        %s459 = smul.addr %s458, 8
        %s460 = scalar_lea.vmem [#allocation8], %s459
        %p461 = pneg %p317
        %p462 = pneg %p314
        %s463 = sand.u32 %s304, 1
        %s464 = scalar_lea.sflag [#allocation10], %s463
        %s465 = sand.u32 %s304, 1
        %s466 = scalar_lea.vmem [#allocation9], %s465
        %p467 = scmp.eq.s32.totalorder %s38, 0
        // Predicated region
        $region87: #{tpu_custom_call.1} parent=81 // pred_check
          %p468 = pneg %p467
        $region88: #{tpu_custom_call.1} parent=81 // pred_check_branch
          %470 = sbr.rel (%p468) target = $region90
        $region89: #{tpu_custom_call.1} parent=81 // pred_region
          %v471 = vld [vmem:[%s419] sm:$0xff]
          %v472 = vld [vmem:[%s419 + $0x8] sm:$0xff]
          %v473 = vld [vmem:[%s419 + $0x10] sm:$0xff]
          %v474 = vld [vmem:[%s419 + $0x18] sm:$0xff]
          %475 = vst [vmem:[#allocation2] sm:$0xff] %v471
          %476 = vst [vmem:[#allocation2 + $0x8] sm:$0xff] %v472
          %477 = vst [vmem:[#allocation2 + $0x10] sm:$0xff] %v473
          %478 = vst [vmem:[#allocation2 + $0x18] sm:$0xff] %v474
        $region90: #{tpu_custom_call.1} parent=81 // pred_fallthru
          _
        %s479 = smul.u32 %s38, 8
        %s480 = scalar_lea.vmem %s1, %s479
        %v481 = vld [vmem:[%s480] sm:$0xff]
        %s482 = scalar_lea.vmem %s2, %s479
        %v483 = vld [vmem:[%s482] sm:$0xff]
        %s484 = smul.u32 %s38, 64
        %s485 = scalar_lea.vmem %s3, %s484
        %v486 = vld [vmem:[%s485] sm:$0xff]
        %v487 = vld [vmem:[%s485 + $0x8] sm:$0xff]
        %v488 = vld [vmem:[%s485 + $0x10] sm:$0xff]
        %v489 = vld [vmem:[%s485 + $0x18] sm:$0xff]
        %v490 = vld [vmem:[%s485 + $0x20] sm:$0xff]
        %v491 = vld [vmem:[%s485 + $0x28] sm:$0xff]
        %v492 = vld [vmem:[%s485 + $0x30] sm:$0xff]
        %v493 = vld [vmem:[%s485 + $0x38] sm:$0xff]
        %s494 = smul.u32 %s38, 16
        %s495 = scalar_lea.vmem %s4, %s494
        %v496 = vld [vmem:[%s495] sm:$0xff]
        %v497 = vld [vmem:[%s495 + $0x8] sm:$0xff]
        %s498 = smul.u32 %s38, 32
        %s499 = scalar_lea.vmem %s5, %s498
        %v500 = vld [vmem:[%s499] sm:$0xff]
        %v501 = vld [vmem:[%s499 + $0x8] sm:$0xff]
        %v502 = vld [vmem:[%s499 + $0x10] sm:$0xff]
        %v503 = vld [vmem:[%s499 + $0x18] sm:$0xff]
        %s504 = scalar_lea.vmem %s6, %s498
        %v505 = vld [vmem:[%s504] sm:$0xff]
        %v506 = vld [vmem:[%s504 + $0x8] sm:$0xff]
        %v507 = vld [vmem:[%s504 + $0x10] sm:$0xff]
        %v508 = vld [vmem:[%s504 + $0x18] sm:$0xff]
        %v509 = vld [vmem:[#allocation2] sm:$0xff]
        %v510 = vld [vmem:[#allocation2 + $0x8] sm:$0xff]
        %v511 = vld [vmem:[#allocation2 + $0x10] sm:$0xff]
        %v512 = vld [vmem:[#allocation2 + $0x18] sm:$0xff]
        %514 = vset.pattern.permute.xlu0 0
        %515 = vperm.xlu0 %514, %v483
        %v516 = vpop.permute.xlu0 %515
        %vm518 = vcmask 261120
        %v520 = vsel %vm518, %v481, 0
        %522 = vmatprep.subr.mxu0 0.0
        %523 = vmatpush1.msra.mxu0 %v509
        %524 = vmatprep.subr.mxu0 0.0
        %525 = vmatpush1.msra.mxu0 %v510
        %526 = vmatprep.subr.mxu0 0.0
        %527 = vmatpush1.msra.mxu0 %v511
        %528 = vmatprep.subr.mxu0 0.0
        %529 = vmatpush1.msra.mxu0 %v512
        %530 = vmatprep.subr.mxu0 0.0
        %531 = vmatpush1.msra.mxu0 0.0
        %532 = vmatprep.subr.mxu0 0.0
        %533 = vmatpush1.msra.mxu0 0.0
        %534 = vmatprep.subr.mxu0 0.0
        %535 = vmatpush1.msra.mxu0 0.0
        %536 = vmatprep.subr.mxu0 0.0
        %537 = vmatpush1.msra.mxu0 0.0
        %538 = vmatprep.subr.mxu0 0.0
        %539 = vmatpush1.msra.mxu0 0.0
        %540 = vmatprep.subr.mxu0 0.0
        %541 = vmatpush1.msra.mxu0 0.0
        %542 = vmatprep.subr.mxu0 0.0
        %543 = vmatpush1.msra.mxu0 0.0
        %544 = vmatprep.subr.mxu0 0.0
        %545 = vmatpush1.msra.mxu0 0.0
        %546 = vmatprep.subr.mxu0 0.0
        %547 = vmatpush1.msra.mxu0 0.0
        %548 = vmatprep.subr.mxu0 0.0
        %549 = vmatpush1.msra.mxu0 0.0
        %550 = vmatprep.subr.mxu0 0.0
        %551 = vmatpush1.msra.mxu0 0.0
        %552 = vmatprep.subr.mxu0 0.0
        %553 = vmatpush1.msra.mxu0 0.0
        %554 = vmatprep.subr.mxu0 0.0
        %555 = vmatpush1.msra.mxu0 0.0
        %556 = vmatprep.subr.mxu0 0.0
        %557 = vmatpush1.msra.mxu0 0.0
        %558 = vmatprep.subr.mxu0 0.0
        %559 = vmatpush1.msra.mxu0 0.0
        %560 = vmatprep.subr.mxu0 0.0
        %561 = vmatpush1.msra.mxu0 0.0
        %562 = vmatprep.subr.mxu0 0.0
        %563 = vmatpush1.msra.mxu0 0.0
        %564 = vmatprep.subr.mxu0 0.0
        %565 = vmatpush1.msra.mxu0 0.0
        %566 = vmatprep.subr.mxu0 0.0
        %567 = vmatpush1.msra.mxu0 0.0
        %568 = vmatprep.subr.mxu0 0.0
        %569 = vmatpush1.msra.mxu0 0.0
        %570 = vmatprep.subr.mxu0 0.0
        %571 = vmatpush1.msra.mxu0 0.0
        %572 = vmatprep.subr.mxu0 0.0
        %573 = vmatpush1.msra.mxu0 0.0
        %574 = vmatprep.subr.mxu0 0.0
        %575 = vmatpush1.msra.mxu0 0.0
        %576 = vmatprep.subr.mxu0 0.0
        %577 = vmatpush1.msra.mxu0 0.0
        %578 = vmatprep.subr.mxu0 0.0
        %579 = vmatpush1.msra.mxu0 0.0
        %580 = vmatprep.subr.mxu0 0.0
        %581 = vmatpush1.msra.mxu0 0.0
        %582 = vmatprep.subr.mxu0 0.0
        %583 = vmatpush1.msra.mxu0 0.0
        %584 = vmatprep.subr.mxu0 0.0
        %585 = vmatpush1.msra.mxu0 0.0
        %586 = vmatprep.mubr.f32.mxu0 0.0
        %587 = vmatmul.mubr.f32.gmra.mrb[0].mxu0 %v520
        %v588 = vpop.f32.mrb[0].mxu0
        %v589 = vadd.f32 %v516, %v588
        %v590 = vpop.f32.mrb[0].mxu0
        %591 = vdwg.mxu0
        %v592 = vmul.f32 %v589, %v589
        %v593 = vrot.slane %v592, 4
        %v594 = vadd.f32 %v592, %v593
        %v595 = vrot.slane %v594, 2
        %v596 = vadd.f32 %v594, %v595
        %v597 = vrot.slane %v596, 1
        %v598 = vadd.f32 %v596, %v597
        %v599 = vmax.f32 %v598, 1e-24
        %v600 = vrsqrt.pop %v599
        %v601 = vmul.f32 %v589, %v600
        %vm602 = vcmask 64512
        %v604 = vsel %vm602, %v486, 0
        %v607 = vsel %vm602, %v487, 0
        %v610 = vsel %vm602, %v488, 0
        %v613 = vsel %vm602, %v489, 0
        %v616 = vsel %vm602, %v490, 0
        %v619 = vsel %vm602, %v491, 0
        %v622 = vsel %vm602, %v492, 0
        %v625 = vsel %vm602, %v493, 0
        %627 = vmatprep.subr.mxu0 0.0
        %628 = vmatpush1.msra.mxu0 %v601
        %629 = vmatprep.subr.mxu0 0.0
        %630 = vmatpush1.msra.mxu0 0.0
        %631 = vmatprep.subr.mxu0 0.0
        %632 = vmatpush1.msra.mxu0 0.0
        %633 = vmatprep.subr.mxu0 0.0
        %634 = vmatpush1.msra.mxu0 0.0
        %635 = vmatprep.subr.mxu0 0.0
        %636 = vmatpush1.msra.mxu0 0.0
        %637 = vmatprep.subr.mxu0 0.0
        %638 = vmatpush1.msra.mxu0 0.0
        %639 = vmatprep.subr.mxu0 0.0
        %640 = vmatpush1.msra.mxu0 0.0
        %641 = vmatprep.subr.mxu0 0.0
        %642 = vmatpush1.msra.mxu0 0.0
        %643 = vmatprep.subr.mxu0 0.0
        %644 = vmatpush1.msra.mxu0 0.0
        %645 = vmatprep.subr.mxu0 0.0
        %646 = vmatpush1.msra.mxu0 0.0
        %647 = vmatprep.subr.mxu0 0.0
        %648 = vmatpush1.msra.mxu0 0.0
        %649 = vmatprep.subr.mxu0 0.0
        %650 = vmatpush1.msra.mxu0 0.0
        %651 = vmatprep.subr.mxu0 0.0
        %652 = vmatpush1.msra.mxu0 0.0
        %653 = vmatprep.subr.mxu0 0.0
        %654 = vmatpush1.msra.mxu0 0.0
        %655 = vmatprep.subr.mxu0 0.0
        %656 = vmatpush1.msra.mxu0 0.0
        %657 = vmatprep.subr.mxu0 0.0
        %658 = vmatpush1.msra.mxu0 0.0
        %659 = vmatprep.subr.mxu0 0.0
        %660 = vmatpush1.msra.mxu0 0.0
        %661 = vmatprep.subr.mxu0 0.0
        %662 = vmatpush1.msra.mxu0 0.0
        %663 = vmatprep.subr.mxu0 0.0
        %664 = vmatpush1.msra.mxu0 0.0
        %665 = vmatprep.subr.mxu0 0.0
        %666 = vmatpush1.msra.mxu0 0.0
        %667 = vmatprep.subr.mxu0 0.0
        %668 = vmatpush1.msra.mxu0 0.0
        %669 = vmatprep.subr.mxu0 0.0
        %670 = vmatpush1.msra.mxu0 0.0
        %671 = vmatprep.subr.mxu0 0.0
        %672 = vmatpush1.msra.mxu0 0.0
        %673 = vmatprep.subr.mxu0 0.0
        %674 = vmatpush1.msra.mxu0 0.0
        %675 = vmatprep.subr.mxu0 0.0
        %676 = vmatpush1.msra.mxu0 0.0
        %677 = vmatprep.subr.mxu0 0.0
        %678 = vmatpush1.msra.mxu0 0.0
        %679 = vmatprep.subr.mxu0 0.0
        %680 = vmatpush1.msra.mxu0 0.0
        %681 = vmatprep.subr.mxu0 0.0
        %682 = vmatpush1.msra.mxu0 0.0
        %683 = vmatprep.subr.mxu0 0.0
        %684 = vmatpush1.msra.mxu0 0.0
        %685 = vmatprep.subr.mxu0 0.0
        %686 = vmatpush1.msra.mxu0 0.0
        %687 = vmatprep.subr.mxu0 0.0
        %688 = vmatpush1.msra.mxu0 0.0
        %689 = vmatprep.subr.mxu0 0.0
        %690 = vmatpush1.msra.mxu0 0.0
        %691 = vmatprep.mubr.f32.mxu0 0.0
        %692 = vmatmul.mubr.f32.gmra.mrb[0].mxu0 %v604
        %v693 = vpop.f32.mrb[0].mxu0
        %v694 = vadd.f32 0.0, %v693
        %v695 = vpop.f32.mrb[0].mxu0
        %696 = vmatprep.mubr.f32.mxu0 0.0
        %697 = vmatmul.mubr.f32.gmra.mrb[0].mxu0 %v607
        %v698 = vpop.f32.mrb[0].mxu0
        %v699 = vadd.f32 0.0, %v698
        %v700 = vpop.f32.mrb[0].mxu0
        %701 = vmatprep.mubr.f32.mxu0 0.0
        %702 = vmatmul.mubr.f32.gmra.mrb[0].mxu0 %v610
        %v703 = vpop.f32.mrb[0].mxu0
        %v704 = vadd.f32 0.0, %v703
        %v705 = vpop.f32.mrb[0].mxu0
        %706 = vmatprep.mubr.f32.mxu0 0.0
        %707 = vmatmul.mubr.f32.gmra.mrb[0].mxu0 %v613
        %v708 = vpop.f32.mrb[0].mxu0
        %v709 = vadd.f32 0.0, %v708
        %v710 = vpop.f32.mrb[0].mxu0
        %711 = vmatprep.mubr.f32.mxu0 0.0
        %712 = vmatmul.mubr.f32.gmra.mrb[0].mxu0 %v616
        %v713 = vpop.f32.mrb[0].mxu0
        %v714 = vadd.f32 0.0, %v713
        %v715 = vpop.f32.mrb[0].mxu0
        %716 = vmatprep.mubr.f32.mxu0 0.0
        %717 = vmatmul.mubr.f32.gmra.mrb[0].mxu0 %v619
        %v718 = vpop.f32.mrb[0].mxu0
        %v719 = vadd.f32 0.0, %v718
        %v720 = vpop.f32.mrb[0].mxu0
        %721 = vmatprep.mubr.f32.mxu0 0.0
        %722 = vmatmul.mubr.f32.gmra.mrb[0].mxu0 %v622
        %v723 = vpop.f32.mrb[0].mxu0
        %v724 = vadd.f32 0.0, %v723
        %v725 = vpop.f32.mrb[0].mxu0
        %726 = vmatprep.mubr.f32.mxu0 0.0
        %727 = vmatmul.mubr.f32.gmra.mrb[0].mxu0 %v625
        %v728 = vpop.f32.mrb[0].mxu0
        %v729 = vadd.f32 0.0, %v728
        %v730 = vpop.f32.mrb[0].mxu0
        %731 = vdwg.mxu0
        %v732 = vmax.f32 %v694, %v714
        %v733 = vmax.f32 %v699, %v719
        %v734 = vmax.f32 %v704, %v724
        %v735 = vmax.f32 %v709, %v729
        %v736 = vmax.f32 %v732, %v733
        %v737 = vmax.f32 %v734, %v735
        %v738 = vmax.f32 %v736, %v737
        %v739 = vrot.slane %v738, 4
        %v740 = vmax.f32 %v738, %v739
        %v741 = vrot.slane %v740, 2
        %v742 = vmax.f32 %v740, %v741
        %v743 = vrot.slane %v742, 1
        %v744 = vmax.f32 %v742, %v743
        %vm745 = vcmp.eq.f32.partialorder %v694, %v744
        %vm746 = vcmp.eq.f32.partialorder %v699, %v744
        %vm747 = vcmp.eq.f32.partialorder %v704, %v744
        %vm748 = vcmp.eq.f32.partialorder %v709, %v744
        %vm749 = vcmp.eq.f32.partialorder %v714, %v744
        %vm750 = vcmp.eq.f32.partialorder %v719, %v744
        %vm751 = vcmp.eq.f32.partialorder %v724, %v744
        %vm752 = vcmp.eq.f32.partialorder %v729, %v744
        %v753 = vsel %vm745, 1, 0
        %v754 = vsel %vm746, 1, 0
        %v755 = vsel %vm747, 1, 0
        %v756 = vsel %vm748, 1, 0
        %v757 = vsel %vm749, 1, 0
        %v758 = vsel %vm750, 1, 0
        %v759 = vsel %vm751, 1, 0
        %v760 = vsel %vm752, 1, 0
        %v761 = vcvt.s32.f32 %v753
        %v762 = vcvt.s32.f32 %v754
        %v763 = vcvt.s32.f32 %v755
        %v764 = vcvt.s32.f32 %v756
        %v765 = vcvt.s32.f32 %v757
        %v766 = vcvt.s32.f32 %v758
        %v767 = vcvt.s32.f32 %v759
        %v768 = vcvt.s32.f32 %v760
        %vm769 = vcmask 523264
        %v771 = vsel %vm769, %v496, 0
        %v774 = vsel %vm769, %v497, 0
        %776 = vmatprep.subr.mxu0 0.0
        %777 = vmatpush1.msra.mxu0 %v761
        %778 = vmatprep.subr.mxu0 0.0
        %779 = vmatpush1.msra.mxu0 %v762
        %780 = vmatprep.subr.mxu0 0.0
        %781 = vmatpush1.msra.mxu0 %v763
        %782 = vmatprep.subr.mxu0 0.0
        %783 = vmatpush1.msra.mxu0 %v764
        %784 = vmatprep.subr.mxu0 0.0
        %785 = vmatpush1.msra.mxu0 %v765
        %786 = vmatprep.subr.mxu0 0.0
        %787 = vmatpush1.msra.mxu0 %v766
        %788 = vmatprep.subr.mxu0 0.0
        %789 = vmatpush1.msra.mxu0 %v767
        %790 = vmatprep.subr.mxu0 0.0
        %791 = vmatpush1.msra.mxu0 %v768
        %792 = vmatprep.subr.mxu0 0.0
        %793 = vmatpush1.msra.mxu0 0.0
        %794 = vmatprep.subr.mxu0 0.0
        %795 = vmatpush1.msra.mxu0 0.0
        %796 = vmatprep.subr.mxu0 0.0
        %797 = vmatpush1.msra.mxu0 0.0
        %798 = vmatprep.subr.mxu0 0.0
        %799 = vmatpush1.msra.mxu0 0.0
        %800 = vmatprep.subr.mxu0 0.0
        %801 = vmatpush1.msra.mxu0 0.0
        %802 = vmatprep.subr.mxu0 0.0
        %803 = vmatpush1.msra.mxu0 0.0
        %804 = vmatprep.subr.mxu0 0.0
        %805 = vmatpush1.msra.mxu0 0.0
        %806 = vmatprep.subr.mxu0 0.0
        %807 = vmatpush1.msra.mxu0 0.0
        %808 = vmatprep.subr.mxu0 0.0
        %809 = vmatpush1.msra.mxu0 0.0
        %810 = vmatprep.subr.mxu0 0.0
        %811 = vmatpush1.msra.mxu0 0.0
        %812 = vmatprep.subr.mxu0 0.0
        %813 = vmatpush1.msra.mxu0 0.0
        %814 = vmatprep.subr.mxu0 0.0
        %815 = vmatpush1.msra.mxu0 0.0
        %816 = vmatprep.subr.mxu0 0.0
        %817 = vmatpush1.msra.mxu0 0.0
        %818 = vmatprep.subr.mxu0 0.0
        %819 = vmatpush1.msra.mxu0 0.0
        %820 = vmatprep.subr.mxu0 0.0
        %821 = vmatpush1.msra.mxu0 0.0
        %822 = vmatprep.subr.mxu0 0.0
        %823 = vmatpush1.msra.mxu0 0.0
        %824 = vmatprep.subr.mxu0 0.0
        %825 = vmatpush1.msra.mxu0 0.0
        %826 = vmatprep.subr.mxu0 0.0
        %827 = vmatpush1.msra.mxu0 0.0
        %828 = vmatprep.subr.mxu0 0.0
        %829 = vmatpush1.msra.mxu0 0.0
        %830 = vmatprep.subr.mxu0 0.0
        %831 = vmatpush1.msra.mxu0 0.0
        %832 = vmatprep.subr.mxu0 0.0
        %833 = vmatpush1.msra.mxu0 0.0
        %834 = vmatprep.subr.mxu0 0.0
        %835 = vmatpush1.msra.mxu0 0.0
        %836 = vmatprep.subr.mxu0 0.0
        %837 = vmatpush1.msra.mxu0 0.0
        %838 = vmatprep.subr.mxu0 0.0
        %839 = vmatpush1.msra.mxu0 0.0
        %840 = vmatprep.mubr.f32.mxu0 0.0
        %841 = vmatmul.mubr.f32.gmra.mrb[0].mxu0 %v771
        %v842 = vpop.f32.mrb[0].mxu0
        %v843 = vadd.f32 0.0, %v842
        %v844 = vpop.f32.mrb[0].mxu0
        %845 = vmatprep.mubr.f32.mxu0 0.0
        %846 = vmatmul.mubr.f32.gmra.mrb[0].mxu0 %v774
        %v847 = vpop.f32.mrb[0].mxu0
        %v848 = vadd.f32 0.0, %v847
        %v849 = vpop.f32.mrb[0].mxu0
        %850 = vdwg.mxu0
        %v851 = vcvt.f32.s32.to.zero.pseudo %v848
        %852 = vst [vmem:[%s453] sm:$0x1] %v851
        %853 = vst [vmem:[%s460] sm:$0xff] %v589
        %v854 = vsub.f32 %v589, %v843
        %v855 = vmul.f32 %v854, %v854
        %v856 = vrot.slane %v855, 4
        %v857 = vadd.f32 %v855, %v856
        %v858 = vrot.slane %v857, 2
        %v859 = vadd.f32 %v857, %v858
        %v860 = vrot.slane %v859, 1
        %v861 = vadd.f32 %v859, %v860
        %862 = vst [vmem:[%s466] sm:$0x1] %v861
        %864 = vset.pattern.permute.xlu0 0
        %865 = vperm.xlu0 %864, %v505
        %v866 = vpop.permute.xlu0 %865
        %869 = vset.pattern.permute.xlu0 0
        %870 = vperm.xlu0 %869, %v506
        %v871 = vpop.permute.xlu0 %870
        %874 = vset.pattern.permute.xlu0 0
        %875 = vperm.xlu0 %874, %v507
        %v876 = vpop.permute.xlu0 %875
        %879 = vset.pattern.permute.xlu0 0
        %880 = vperm.xlu0 %879, %v508
        %v881 = vpop.permute.xlu0 %880
        %v884 = vsel %vm602, %v500, 0
        %v887 = vsel %vm602, %v501, 0
        %v890 = vsel %vm602, %v502, 0
        %v893 = vsel %vm602, %v503, 0
        %895 = vmatprep.subr.mxu0 0.0
        %896 = vmatpush1.msra.mxu0 %v843
        %897 = vmatprep.subr.mxu0 0.0
        %898 = vmatpush1.msra.mxu0 0.0
        %899 = vmatprep.subr.mxu0 0.0
        %900 = vmatpush1.msra.mxu0 0.0
        %901 = vmatprep.subr.mxu0 0.0
        %902 = vmatpush1.msra.mxu0 0.0
        %903 = vmatprep.subr.mxu0 0.0
        %904 = vmatpush1.msra.mxu0 0.0
        %905 = vmatprep.subr.mxu0 0.0
        %906 = vmatpush1.msra.mxu0 0.0
        %907 = vmatprep.subr.mxu0 0.0
        %908 = vmatpush1.msra.mxu0 0.0
        %909 = vmatprep.subr.mxu0 0.0
        %910 = vmatpush1.msra.mxu0 0.0
        %911 = vmatprep.subr.mxu0 0.0
        %912 = vmatpush1.msra.mxu0 0.0
        %913 = vmatprep.subr.mxu0 0.0
        %914 = vmatpush1.msra.mxu0 0.0
        %915 = vmatprep.subr.mxu0 0.0
        %916 = vmatpush1.msra.mxu0 0.0
        %917 = vmatprep.subr.mxu0 0.0
        %918 = vmatpush1.msra.mxu0 0.0
        %919 = vmatprep.subr.mxu0 0.0
        %920 = vmatpush1.msra.mxu0 0.0
        %921 = vmatprep.subr.mxu0 0.0
        %922 = vmatpush1.msra.mxu0 0.0
        %923 = vmatprep.subr.mxu0 0.0
        %924 = vmatpush1.msra.mxu0 0.0
        %925 = vmatprep.subr.mxu0 0.0
        %926 = vmatpush1.msra.mxu0 0.0
        %927 = vmatprep.subr.mxu0 0.0
        %928 = vmatpush1.msra.mxu0 0.0
        %929 = vmatprep.subr.mxu0 0.0
        %930 = vmatpush1.msra.mxu0 0.0
        %931 = vmatprep.subr.mxu0 0.0
        %932 = vmatpush1.msra.mxu0 0.0
        %933 = vmatprep.subr.mxu0 0.0
        %934 = vmatpush1.msra.mxu0 0.0
        %935 = vmatprep.subr.mxu0 0.0
        %936 = vmatpush1.msra.mxu0 0.0
        %937 = vmatprep.subr.mxu0 0.0
        %938 = vmatpush1.msra.mxu0 0.0
        %939 = vmatprep.subr.mxu0 0.0
        %940 = vmatpush1.msra.mxu0 0.0
        %941 = vmatprep.subr.mxu0 0.0
        %942 = vmatpush1.msra.mxu0 0.0
        %943 = vmatprep.subr.mxu0 0.0
        %944 = vmatpush1.msra.mxu0 0.0
        %945 = vmatprep.subr.mxu0 0.0
        %946 = vmatpush1.msra.mxu0 0.0
        %947 = vmatprep.subr.mxu0 0.0
        %948 = vmatpush1.msra.mxu0 0.0
        %949 = vmatprep.subr.mxu0 0.0
        %950 = vmatpush1.msra.mxu0 0.0
        %951 = vmatprep.subr.mxu0 0.0
        %952 = vmatpush1.msra.mxu0 0.0
        %953 = vmatprep.subr.mxu0 0.0
        %954 = vmatpush1.msra.mxu0 0.0
        %955 = vmatprep.subr.mxu0 0.0
        %956 = vmatpush1.msra.mxu0 0.0
        %957 = vmatprep.subr.mxu0 0.0
        %958 = vmatpush1.msra.mxu0 0.0
        %959 = vmatprep.mubr.f32.mxu0 0.0
        %960 = vmatmul.mubr.f32.gmra.mrb[0].mxu0 %v884
        %v961 = vpop.f32.mrb[0].mxu0
        %v962 = vadd.f32 %v866, %v961
        %v963 = vpop.f32.mrb[0].mxu0
        %964 = vmatprep.mubr.f32.mxu0 0.0
        %965 = vmatmul.mubr.f32.gmra.mrb[0].mxu0 %v887
        %v966 = vpop.f32.mrb[0].mxu0
        %v967 = vadd.f32 %v871, %v966
        %v968 = vpop.f32.mrb[0].mxu0
        %969 = vmatprep.mubr.f32.mxu0 0.0
        %970 = vmatmul.mubr.f32.gmra.mrb[0].mxu0 %v890
        %v971 = vpop.f32.mrb[0].mxu0
        %v972 = vadd.f32 %v876, %v971
        %v973 = vpop.f32.mrb[0].mxu0
        %974 = vmatprep.mubr.f32.mxu0 0.0
        %975 = vmatmul.mubr.f32.gmra.mrb[0].mxu0 %v893
        %v976 = vpop.f32.mrb[0].mxu0
        %v977 = vadd.f32 %v881, %v976
        %v978 = vpop.f32.mrb[0].mxu0
        %979 = vdwg.mxu0
        %v980 = vsub.f32 %v509, %v962
        %v981 = vsub.f32 %v510, %v967
        %v982 = vsub.f32 %v511, %v972
        %v983 = vsub.f32 %v512, %v977
        %984 = vst [vmem:[#allocation2] sm:$0xff] %v980
        %985 = vst [vmem:[#allocation2 + $0x8] sm:$0xff] %v981
        %986 = vst [vmem:[#allocation2 + $0x10] sm:$0xff] %v982
        %987 = vst [vmem:[#allocation2 + $0x18] sm:$0xff] %v983
        %p988 = scmp.eq.s32.totalorder %s38, 3
        // Predicated region
        $region91: #{tpu_custom_call.1} parent=81 // pred_check
          %p989 = pneg %p988
        $region92: #{tpu_custom_call.1} parent=81 // pred_check_branch
          %991 = sbr.rel (%p989) target = $region94
        $region93: #{tpu_custom_call.1} parent=81 // pred_region
          %v992 = vld [vmem:[%s419] sm:$0xff]
          %v993 = vld [vmem:[%s419 + $0x8] sm:$0xff]
          %v994 = vld [vmem:[%s419 + $0x10] sm:$0xff]
          %v995 = vld [vmem:[%s419 + $0x18] sm:$0xff]
          %v996 = vld [vmem:[#allocation2] sm:$0xff]
          %v997 = vld [vmem:[#allocation2 + $0x8] sm:$0xff]
          %v998 = vld [vmem:[#allocation2 + $0x10] sm:$0xff]
          %v999 = vld [vmem:[#allocation2 + $0x18] sm:$0xff]
          %v1000 = vsub.f32 %v992, %v996
          %v1001 = vsub.f32 %v993, %v997
          %v1002 = vsub.f32 %v994, %v998
          %v1003 = vsub.f32 %v995, %v999
          %1004 = vst [vmem:[%s447] sm:$0xff] %v1000
          %1005 = vst [vmem:[%s447 + $0x8] sm:$0xff] %v1001
          %1006 = vst [vmem:[%s447 + $0x10] sm:$0xff] %v1002
          %1007 = vst [vmem:[%s447 + $0x18] sm:$0xff] %v1003
        $region94: #{tpu_custom_call.1} parent=81 // pred_fallthru
          _
        %s1008 = sand.u32 %s214, 1
        %s1009 = scalar_lea.sflag [#allocation5], %s1008
        %s1010 = sand.u32 %s214, 1
        %s1011 = smul.addr %s1010, 32
        %s1012 = scalar_lea.vmem [#allocation4], %s1011
        %s1013 = sand.u32 %s31, 1
        %s1014 = scalar_lea.sflag [#allocation7], %s1013
        %s1015 = sand.u32 %s244, 1
        %s1016 = scalar_lea.vmem [#allocation6], %s1015
        %s1017 = sand.u32 %s31, 1
        %s1018 = scalar_lea.sflag [#allocation7], %s1017
        %s1019 = sand.u32 %s274, 1
        %s1020 = smul.addr %s1019, 8
        %s1021 = scalar_lea.vmem [#allocation8], %s1020
        %s1022 = sand.u32 %s304, 1
        %s1023 = scalar_lea.sflag [#allocation10], %s1022
        %s1024 = sand.u32 %s304, 1
        %s1025 = scalar_lea.vmem [#allocation9], %s1024
        // Predicated region
        $region95: #{tpu_custom_call.1} parent=81 // pred_check
          %p1026 = pneg %p224
        $region96: #{tpu_custom_call.1} parent=81 // pred_check_branch
          %1028 = sbr.rel (%p1026) target = $region98
        $region97: #{tpu_custom_call.1} parent=81 // pred_region
          %s1030 = ssub.s32 512, 512
          %1031 = vsyncadd %s1009, %s1030
          %s1032 = smul.addr %s36, 8
          %s1033 = sadd.s32 %s37, %s1032
          %s1034 = smul.addr %s1033, 128
          %s1035 = scalar_lea.hbm %s7, %s1034
          %s1036 = sshll.u32 %s1012, 4
          %s1037 = int_to_ptr.vmem [resolvable:$true] %s1036
          %1042 = dma.vmem_to_hbm [thread:$0]  %s1037, 512, %s1035, %s1009, 128, 256, 8
        $region98: #{tpu_custom_call.1} parent=81 // pred_fallthru
          _
        // Predicated region
        $region99: #{tpu_custom_call.1} parent=81 // pred_check
          %p1043 = pneg %p254
        $region100: #{tpu_custom_call.1} parent=81 // pred_check_branch
          %1045 = sbr.rel (%p1043) target = $region102
        $region101: #{tpu_custom_call.1} parent=81 // pred_region
          %s1047 = ssub.s32 16, 16
          %1048 = vsyncadd %s1014, %s1047
          %s1049 = smul.addr %s36, 2
          %s1050 = sadd.s32 %s37, %s1049
          %s1051 = smul.addr %s38, 4
          %s1052 = sadd.s32 %s1050, %s1051
          %s1053 = smul.addr %s1052, 16
          %s1054 = scalar_lea.hbm %s8, %s1053
          %s1056 = sshll.u32 %s1016, 4
          %s1057 = int_to_ptr.vmem [resolvable:$true] %s1056
          %1059 = dma.vmem_to_hbm [thread:$0]  %s1057, 16, %s1054, %s1014
        $region102: #{tpu_custom_call.1} parent=81 // pred_fallthru
          _
        // Predicated region
        $region103: #{tpu_custom_call.1} parent=81 // pred_check
          %p1060 = pneg %p284
        $region104: #{tpu_custom_call.1} parent=81 // pred_check_branch
          %1062 = sbr.rel (%p1060) target = $region106
        $region105: #{tpu_custom_call.1} parent=81 // pred_region
          %s1064 = ssub.s32 128, 128
          %1065 = vsyncadd %s1018, %s1064
          %s1066 = smul.addr %s36, 2
          %s1067 = sadd.s32 %s37, %s1066
          %s1068 = smul.addr %s38, 4
          %s1069 = sadd.s32 %s1067, %s1068
          %s1070 = smul.addr %s1069, 128
          %s1071 = scalar_lea.hbm %s9, %s1070
          %s1073 = sshll.u32 %s1021, 4
          %s1074 = int_to_ptr.vmem [resolvable:$true] %s1073
          %1076 = dma.vmem_to_hbm [thread:$0]  %s1074, 128, %s1071, %s1018
        $region106: #{tpu_custom_call.1} parent=81 // pred_fallthru
          _
        // Predicated region
        $region107: #{tpu_custom_call.1} parent=81 // pred_check
          %p1077 = pneg %p314
        $region108: #{tpu_custom_call.1} parent=81 // pred_check_branch
          %1079 = sbr.rel (%p1077) target = $region110
        $region109: #{tpu_custom_call.1} parent=81 // pred_region
          %s1081 = ssub.s32 16, 16
          %1082 = vsyncadd %s1023, %s1081
          %s1083 = smul.addr %s36, 2
          %s1084 = sadd.s32 %s37, %s1083
          %s1085 = smul.addr %s38, 4
          %s1086 = sadd.s32 %s1084, %s1085
          %s1087 = smul.addr %s1086, 16
          %s1088 = scalar_lea.hbm %s10, %s1087
          %s1090 = sshll.u32 %s1025, 4
          %s1091 = int_to_ptr.vmem [resolvable:$true] %s1090
          %1093 = dma.vmem_to_hbm [thread:$0]  %s1091, 16, %s1088, %s1023
        $region110: #{tpu_custom_call.1} parent=81 // pred_fallthru
          _
      $region82: #{tpu_custom_call.1} parent=5 // pred_fallthru
        _
      %p1094 = scmp.le.s32.totalorder 2, %s26
      // Predicated region
      $region111: #{tpu_custom_call.1} parent=5 // pred_check
        %p1095 = pneg %p1094
      $region112: #{tpu_custom_call.1} parent=5 // pred_check_branch
        %1097 = sbr.rel (%p1095) target = $region114
      $region113: #{tpu_custom_call.1} parent=5 // pred_region
        %s1098 = ssub.s32 %s26, 2
        // Predicated region
        $region115: #{tpu_custom_call.1} parent=113 // pred_check
          %p1099 = pneg %p230
        $region116: #{tpu_custom_call.1} parent=113 // pred_check_branch
          %1101 = sbr.rel (%p1099) target = $region118
        $region117: #{tpu_custom_call.1} parent=113 // pred_region
          %s1102 = sand.u32 %s215, 1
          %s1103 = scalar_lea.sflag [#allocation5], %s1102
          %s1104 = sand.u32 %s215, 1
          %s1105 = smul.addr %s1104, 32
          %s1106 = scalar_lea.vmem [#allocation4], %s1105
          %1107 = dma.done %s1103, 512
        $region118: #{tpu_custom_call.1} parent=113 // pred_fallthru
          _
        // Predicated region
        $region119: #{tpu_custom_call.1} parent=113 // pred_check
          %p1108 = pneg %p260
        $region120: #{tpu_custom_call.1} parent=113 // pred_check_branch
          %1110 = sbr.rel (%p1108) target = $region122
        $region121: #{tpu_custom_call.1} parent=113 // pred_region
          %s1111 = sand.u32 %s32, 1
          %s1112 = scalar_lea.sflag [#allocation7], %s1111
          %s1113 = sand.u32 %s245, 1
          %s1114 = scalar_lea.vmem [#allocation6], %s1113
          %1115 = dma.done %s1112, 16
        $region122: #{tpu_custom_call.1} parent=113 // pred_fallthru
          _
        // Predicated region
        $region123: #{tpu_custom_call.1} parent=113 // pred_check
          %p1116 = pneg %p290
        $region124: #{tpu_custom_call.1} parent=113 // pred_check_branch
          %1118 = sbr.rel (%p1116) target = $region126
        $region125: #{tpu_custom_call.1} parent=113 // pred_region
          %s1119 = sand.u32 %s32, 1
          %s1120 = scalar_lea.sflag [#allocation7], %s1119
          %s1121 = sand.u32 %s275, 1
          %s1122 = smul.addr %s1121, 8
          %s1123 = scalar_lea.vmem [#allocation8], %s1122
          %1124 = dma.done %s1120, 128
        $region126: #{tpu_custom_call.1} parent=113 // pred_fallthru
          _
        // Predicated region
        $region127: #{tpu_custom_call.1} parent=113 // pred_check
          %p1125 = pneg %p320
        $region128: #{tpu_custom_call.1} parent=113 // pred_check_branch
          %1127 = sbr.rel (%p1125) target = $region130
        $region129: #{tpu_custom_call.1} parent=113 // pred_region
          %s1128 = sand.u32 %s305, 1
          %s1129 = scalar_lea.sflag [#allocation10], %s1128
          %s1130 = sand.u32 %s305, 1
          %s1131 = scalar_lea.vmem [#allocation9], %s1130
          %1132 = dma.done %s1129, 16
        $region130: #{tpu_custom_call.1} parent=113 // pred_fallthru
          _
      $region114: #{tpu_custom_call.1} parent=5 // pred_fallthru
        _
    $region6: #{tpu_custom_call.1} parent=1 // loop_footer
      %s30 = sadd.s32 1, %s26
    $region7: #{tpu_custom_call.1} parent=1 // loop_footer_branch
      %25 = sbr.rel target = $region3
    $region8: #{tpu_custom_call.1} parent=1 // loop_exit
      _
    %1133 = vsyncpa [#allocation5], 1
    %s1134 = scalar_lea.sflag [#allocation5], 1
    %1135 = vsyncpa %s1134, 1
    %1136 = vsyncpa [#allocation7], 1
    %s1137 = scalar_lea.sflag [#allocation7], 1
    %1138 = vsyncpa %s1137, 1
    %1139 = vsyncpa [#allocation10], 1
    %s1140 = scalar_lea.sflag [#allocation10], 1
    %1141 = vsyncpa %s1140, 1

</llo_original>
